<compile_context>
chip_gen: v6e
topology: v6e:2x2x1
jax: 0.10.0
libtpu: 0.0.40
codegen_flags: <defaults>
</compile_context>

<pallas_src>
import functools

import jax
import jax.numpy as jnp
from jax.experimental import pallas as pl
from jax.experimental.pallas import tpu as pltpu

# Original (PyTorch) layer sizes.
SIZES = [100, 150, 200, 250, 200, 150, 100]
N_LAYERS = len(SIZES) - 1          # 6

IN_PAD = 128                       # 100 -> 128 (input lanes)
HID_PAD = 256                      # 150/200/250/200/150 -> 256 (hidden lanes)
OUT_PAD = 128                      # 100 -> 128 (output lanes)


def _mlp_kernel(x_ref, w0_ref, wm_ref, w5_ref, bm_ref, b5_ref, o_ref):
    """x_ref: (TB, 128) bf16
       w0_ref: (128, 256) bf16        -- layer 0
       wm_ref: (4, 256, 256) bf16     -- layers 1..4 (packed)
       w5_ref: (256, 128) bf16        -- layer 5
       bm_ref: (5, 1, 256) f32        -- biases layers 0..4
       b5_ref: (1, 128) f32           -- bias layer 5
       o_ref:  (TB, 128) f32"""
    # Layer 0: (TB,128) @ (128,256) + b0, ReLU.
    acc = jnp.dot(x_ref[...], w0_ref[...], preferred_element_type=jnp.float32)
    acc = acc + bm_ref[0]
    h = jnp.maximum(acc, 0.0).astype(jnp.bfloat16)

    # Layers 1..4: (TB,256) @ (256,256) + b, ReLU (statically unrolled).
    for l in range(4):
        acc = jnp.dot(h, wm_ref[l], preferred_element_type=jnp.float32)
        acc = acc + bm_ref[l + 1]
        h = jnp.maximum(acc, 0.0).astype(jnp.bfloat16)

    # Layer 5: (TB,256) @ (256,128) + b5, no ReLU. Store only 128 lanes.
    acc = jnp.dot(h, w5_ref[...], preferred_element_type=jnp.float32)
    o_ref[...] = acc + b5_ref[...]


def _pick_tb(batch, max_tb=1024):
    """Largest tile in {128..max_tb} giving >= 4 grid steps (>=2 per v7x core)."""
    for tb in (1024, 512, 256, 128):
        if tb <= max_tb and batch >= 4 * tb:
            return tb
    return 128


def defnet_forward(x, w0, wm, w5, bm, b5, tb=128):
    """x: (B, 100) f32.  Returns (B, 100) f32."""
    B, F = x.shape
    assert F == SIZES[0]
    b_pad = pl.cdiv(B, tb) * tb

    # Pad batch to a multiple of tb and features 100 -> 128; cast to bf16.
    xp = jnp.zeros((b_pad, IN_PAD), jnp.bfloat16)
    xp = xp.at[:B, :F].set(x.astype(jnp.bfloat16))

    out = pl.pallas_call(
        _mlp_kernel,
        out_shape=jax.ShapeDtypeStruct((b_pad, OUT_PAD), jnp.float32),
        grid_spec=pltpu.PrefetchScalarGridSpec(
            num_scalar_prefetch=0,
            grid=(b_pad // tb,),
            in_specs=[
                pl.BlockSpec((tb, IN_PAD), lambda i: (i, 0)),              # x tile
                pl.BlockSpec((IN_PAD, HID_PAD), lambda i: (0, 0)),          # w0 (resident)
                pl.BlockSpec((4, HID_PAD, HID_PAD), lambda i: (0, 0, 0)),   # w1..w4 (resident)
                pl.BlockSpec((HID_PAD, OUT_PAD), lambda i: (0, 0)),         # w5 (resident)
                pl.BlockSpec((5, 1, HID_PAD), lambda i: (0, 0, 0)),         # b0..b4 (resident)
                pl.BlockSpec((1, OUT_PAD), lambda i: (0, 0)),               # b5 (resident)
            ],
            out_specs=pl.BlockSpec((tb, OUT_PAD), lambda i: (i, 0)),        # 128-lane output
        ),
        compiler_params=pltpu.CompilerParams(
            dimension_semantics=("parallel",)),
    )(xp, w0, wm, w5, bm, b5)

    return out[:B, :SIZES[-1]]


def init_params(key):
    """PyTorch nn.Linear-style init: U(-1/sqrt(fan_in), +1/sqrt(fan_in)).
    Weights stored as (in, out) so the kernel computes x @ W + b (== x @ W_pt.T + b)."""
    ws, bs = [], []
    for i in range(N_LAYERS):
        fan_in, fan_out = SIZES[i], SIZES[i + 1]
        key, kw, kb = jax.random.split(key, 3)
        bound = float(fan_in) ** -0.5
        ws.append(jax.random.uniform(kw, (fan_in, fan_out), jnp.float32, -bound, bound))
        bs.append(jax.random.uniform(kb, (fan_out,), jnp.float32, -bound, bound))
    return ws, bs


def pack_params(ws, bs):
    """Zero-pad per-layer to 128-granular widths (exact: padded rows/cols and
    biases are 0 and ReLU(0)=0) and pack into 5 operands."""
    w0 = jnp.zeros((IN_PAD, HID_PAD), jnp.float32)
    w0 = w0.at[:ws[0].shape[0], :ws[0].shape[1]].set(ws[0])

    wm = jnp.zeros((4, HID_PAD, HID_PAD), jnp.float32)
    for l in range(1, 5):
        w = ws[l]
        wm = wm.at[l - 1, :w.shape[0], :w.shape[1]].set(w)

    w5 = jnp.zeros((HID_PAD, OUT_PAD), jnp.float32)
    w5 = w5.at[:ws[5].shape[0], :ws[5].shape[1]].set(ws[5])

    bm = jnp.zeros((5, 1, HID_PAD), jnp.float32)
    for l in range(5):
        bm = bm.at[l, 0, :bs[l].shape[0]].set(bs[l])

    b5 = jnp.zeros((1, OUT_PAD), jnp.float32)
    b5 = b5.at[0, :bs[5].shape[0]].set(bs[5])

    return (w0.astype(jnp.bfloat16), wm.astype(jnp.bfloat16),
            w5.astype(jnp.bfloat16), bm, b5)


def reference_forward(x, ws, bs):
    h = x
    for i, (w, b) in enumerate(zip(ws, bs)):
        h = h @ w + b[None, :]
        if i < N_LAYERS - 1:
            h = jnp.maximum(h, 0.0)
    return h


if __name__ == "__main__":
    key = jax.random.PRNGKey(0)
    key, kx = jax.random.split(key)

    B = 512  # with tb=128 -> 4 grid steps (>=2 per core on v7x)
    x = jax.random.normal(kx, (B, SIZES[0]), jnp.float32)

    ws, bs = init_params(key)
    params = pack_params(ws, bs)

    tb = _pick_tb(B)
    fwd = jax.jit(functools.partial(defnet_forward, tb=tb))
    out = jax.block_until_ready(fwd(x, *params))

    ref = reference_forward(x, ws, bs)
    assert out.shape == (B, SIZES[-1])
    # bf16 weights/activations in the kernel vs f32 reference -> loose tolerance.
    assert jnp.allclose(out, ref, atol=5e-2, rtol=5e-2), "mismatch vs reference"

    print("KERNEL_OK")
</pallas_src>

<mosaic_0001>
module attributes {stable_mosaic.version = 11 : i64} {
  func.func @_mlp_kernel(%arg0: i32, %arg1: memref<128x128xbf16, #tpu.memory_space<vmem>>, %arg2: memref<128x256xbf16, #tpu.memory_space<vmem>>, %arg3: memref<4x256x256xbf16, #tpu.memory_space<vmem>>, %arg4: memref<256x128xbf16, #tpu.memory_space<vmem>>, %arg5: memref<5x1x256xf32, #tpu.memory_space<vmem>>, %arg6: memref<1x128xf32, #tpu.memory_space<vmem>>, %arg7: memref<128x128xf32, #tpu.memory_space<vmem>>) attributes {dimension_semantics = [#tpu.dimension_semantics<parallel>], iteration_bounds = array<i64: 4>, scalar_prefetch = 0 : i64, scratch_operands = 0 : i64, tpu.core_type = #tpu.core_type<tc>, window_params = [{transform_indices = @transform_0, window_bounds = array<i64: 128, 128>}, {pipeline_mode = #tpu.pipeline_mode<synchronous>, transform_indices = @transform_1, window_bounds = array<i64: 128, 256>}, {pipeline_mode = #tpu.pipeline_mode<synchronous>, transform_indices = @transform_2, window_bounds = array<i64: 4, 256, 256>}, {pipeline_mode = #tpu.pipeline_mode<synchronous>, transform_indices = @transform_3, window_bounds = array<i64: 256, 128>}, {pipeline_mode = #tpu.pipeline_mode<synchronous>, transform_indices = @transform_4, window_bounds = array<i64: 5, 1, 256>}, {pipeline_mode = #tpu.pipeline_mode<synchronous>, transform_indices = @transform_5, window_bounds = array<i64: 1, 128>}, {transform_indices = @transform_6, window_bounds = array<i64: 128, 128>}]} {
    %c0 = arith.constant 0 : index
    %c0_0 = arith.constant 0 : index
    %0 = vector.load %arg1[%c0, %c0_0] : memref<128x128xbf16, #tpu.memory_space<vmem>>, vector<128x128xbf16>
    %c0_1 = arith.constant 0 : index
    %c0_2 = arith.constant 0 : index
    %1 = vector.load %arg2[%c0_1, %c0_2] : memref<128x256xbf16, #tpu.memory_space<vmem>>, vector<128x256xbf16>
    %cst = arith.constant dense<0.000000e+00> : vector<128x256xf32>
    %2 = tpu.matmul %0, %1, %cst {dimension_numbers = #tpu.dot_dimension_numbers<[1], [0], [0], [1], [0, 0, 1, 1], [], []>} : vector<128x128xbf16>, vector<128x256xbf16>, vector<128x256xf32> -> vector<128x256xf32>
    %c0_3 = arith.constant 0 : index
    %c0_4 = arith.constant 0 : index
    %c0_5 = arith.constant 0 : index
    %3 = vector.load %arg5[%c0_3, %c0_4, %c0_5] : memref<5x1x256xf32, #tpu.memory_space<vmem>>, vector<1x1x256xf32>
    %4 = vector.shape_cast %3 : vector<1x1x256xf32> to vector<1x256xf32>
    %5 = vector.broadcast %4 : vector<1x256xf32> to vector<128x256xf32>
    %6 = arith.addf %2, %5 : vector<128x256xf32>
    %cst_6 = arith.constant 0.000000e+00 : f32
    %7 = vector.broadcast %cst_6 : f32 to vector<128x256xf32>
    %8 = arith.maximumf %6, %7 : vector<128x256xf32>
    %9 = arith.truncf %8 : vector<128x256xf32> to vector<128x256xbf16>
    %c0_7 = arith.constant 0 : index
    %c0_8 = arith.constant 0 : index
    %c0_9 = arith.constant 0 : index
    %10 = vector.load %arg3[%c0_7, %c0_8, %c0_9] : memref<4x256x256xbf16, #tpu.memory_space<vmem>>, vector<1x256x256xbf16>
    %11 = vector.shape_cast %10 : vector<1x256x256xbf16> to vector<256x256xbf16>
    %cst_10 = arith.constant dense<0.000000e+00> : vector<128x256xf32>
    %12 = tpu.matmul %9, %11, %cst_10 {dimension_numbers = #tpu.dot_dimension_numbers<[1], [0], [0], [1], [0, 0, 1, 1], [], []>} : vector<128x256xbf16>, vector<256x256xbf16>, vector<128x256xf32> -> vector<128x256xf32>
    %c1 = arith.constant 1 : index
    %c0_11 = arith.constant 0 : index
    %c0_12 = arith.constant 0 : index
    %13 = vector.load %arg5[%c1, %c0_11, %c0_12] : memref<5x1x256xf32, #tpu.memory_space<vmem>>, vector<1x1x256xf32>
    %14 = vector.shape_cast %13 : vector<1x1x256xf32> to vector<1x256xf32>
    %15 = vector.broadcast %14 : vector<1x256xf32> to vector<128x256xf32>
    %16 = arith.addf %12, %15 : vector<128x256xf32>
    %cst_13 = arith.constant 0.000000e+00 : f32
    %17 = vector.broadcast %cst_13 : f32 to vector<128x256xf32>
    %18 = arith.maximumf %16, %17 : vector<128x256xf32>
    %19 = arith.truncf %18 : vector<128x256xf32> to vector<128x256xbf16>
    %c1_14 = arith.constant 1 : index
    %c0_15 = arith.constant 0 : index
    %c0_16 = arith.constant 0 : index
    %20 = vector.load %arg3[%c1_14, %c0_15, %c0_16] : memref<4x256x256xbf16, #tpu.memory_space<vmem>>, vector<1x256x256xbf16>
    %21 = vector.shape_cast %20 : vector<1x256x256xbf16> to vector<256x256xbf16>
    %cst_17 = arith.constant dense<0.000000e+00> : vector<128x256xf32>
    %22 = tpu.matmul %19, %21, %cst_17 {dimension_numbers = #tpu.dot_dimension_numbers<[1], [0], [0], [1], [0, 0, 1, 1], [], []>} : vector<128x256xbf16>, vector<256x256xbf16>, vector<128x256xf32> -> vector<128x256xf32>
    %c2 = arith.constant 2 : index
    %c0_18 = arith.constant 0 : index
    %c0_19 = arith.constant 0 : index
    %23 = vector.load %arg5[%c2, %c0_18, %c0_19] : memref<5x1x256xf32, #tpu.memory_space<vmem>>, vector<1x1x256xf32>
    %24 = vector.shape_cast %23 : vector<1x1x256xf32> to vector<1x256xf32>
    %25 = vector.broadcast %24 : vector<1x256xf32> to vector<128x256xf32>
    %26 = arith.addf %22, %25 : vector<128x256xf32>
    %cst_20 = arith.constant 0.000000e+00 : f32
    %27 = vector.broadcast %cst_20 : f32 to vector<128x256xf32>
    %28 = arith.maximumf %26, %27 : vector<128x256xf32>
    %29 = arith.truncf %28 : vector<128x256xf32> to vector<128x256xbf16>
    %c2_21 = arith.constant 2 : index
    %c0_22 = arith.constant 0 : index
    %c0_23 = arith.constant 0 : index
    %30 = vector.load %arg3[%c2_21, %c0_22, %c0_23] : memref<4x256x256xbf16, #tpu.memory_space<vmem>>, vector<1x256x256xbf16>
    %31 = vector.shape_cast %30 : vector<1x256x256xbf16> to vector<256x256xbf16>
    %cst_24 = arith.constant dense<0.000000e+00> : vector<128x256xf32>
    %32 = tpu.matmul %29, %31, %cst_24 {dimension_numbers = #tpu.dot_dimension_numbers<[1], [0], [0], [1], [0, 0, 1, 1], [], []>} : vector<128x256xbf16>, vector<256x256xbf16>, vector<128x256xf32> -> vector<128x256xf32>
    %c3 = arith.constant 3 : index
    %c0_25 = arith.constant 0 : index
    %c0_26 = arith.constant 0 : index
    %33 = vector.load %arg5[%c3, %c0_25, %c0_26] : memref<5x1x256xf32, #tpu.memory_space<vmem>>, vector<1x1x256xf32>
    %34 = vector.shape_cast %33 : vector<1x1x256xf32> to vector<1x256xf32>
    %35 = vector.broadcast %34 : vector<1x256xf32> to vector<128x256xf32>
    %36 = arith.addf %32, %35 : vector<128x256xf32>
    %cst_27 = arith.constant 0.000000e+00 : f32
    %37 = vector.broadcast %cst_27 : f32 to vector<128x256xf32>
    %38 = arith.maximumf %36, %37 : vector<128x256xf32>
    %39 = arith.truncf %38 : vector<128x256xf32> to vector<128x256xbf16>
    %c3_28 = arith.constant 3 : index
    %c0_29 = arith.constant 0 : index
    %c0_30 = arith.constant 0 : index
    %40 = vector.load %arg3[%c3_28, %c0_29, %c0_30] : memref<4x256x256xbf16, #tpu.memory_space<vmem>>, vector<1x256x256xbf16>
    %41 = vector.shape_cast %40 : vector<1x256x256xbf16> to vector<256x256xbf16>
    %cst_31 = arith.constant dense<0.000000e+00> : vector<128x256xf32>
    %42 = tpu.matmul %39, %41, %cst_31 {dimension_numbers = #tpu.dot_dimension_numbers<[1], [0], [0], [1], [0, 0, 1, 1], [], []>} : vector<128x256xbf16>, vector<256x256xbf16>, vector<128x256xf32> -> vector<128x256xf32>
    %c4 = arith.constant 4 : index
    %c0_32 = arith.constant 0 : index
    %c0_33 = arith.constant 0 : index
    %43 = vector.load %arg5[%c4, %c0_32, %c0_33] : memref<5x1x256xf32, #tpu.memory_space<vmem>>, vector<1x1x256xf32>
    %44 = vector.shape_cast %43 : vector<1x1x256xf32> to vector<1x256xf32>
    %45 = vector.broadcast %44 : vector<1x256xf32> to vector<128x256xf32>
    %46 = arith.addf %42, %45 : vector<128x256xf32>
    %cst_34 = arith.constant 0.000000e+00 : f32
    %47 = vector.broadcast %cst_34 : f32 to vector<128x256xf32>
    %48 = arith.maximumf %46, %47 : vector<128x256xf32>
    %49 = arith.truncf %48 : vector<128x256xf32> to vector<128x256xbf16>
    %c0_35 = arith.constant 0 : index
    %c0_36 = arith.constant 0 : index
    %50 = vector.load %arg4[%c0_35, %c0_36] : memref<256x128xbf16, #tpu.memory_space<vmem>>, vector<256x128xbf16>
    %cst_37 = arith.constant dense<0.000000e+00> : vector<128x128xf32>
    %51 = tpu.matmul %49, %50, %cst_37 {dimension_numbers = #tpu.dot_dimension_numbers<[1], [0], [0], [1], [0, 0, 1, 1], [], []>} : vector<128x256xbf16>, vector<256x128xbf16>, vector<128x128xf32> -> vector<128x128xf32>
    %c0_38 = arith.constant 0 : index
    %c0_39 = arith.constant 0 : index
    %52 = vector.load %arg6[%c0_38, %c0_39] : memref<1x128xf32, #tpu.memory_space<vmem>>, vector<1x128xf32>
    %53 = vector.broadcast %52 : vector<1x128xf32> to vector<128x128xf32>
    %54 = arith.addf %51, %53 : vector<128x128xf32>
    %c0_40 = arith.constant 0 : index
    %c0_41 = arith.constant 0 : index
    %55 = vector.load %arg7[%c0_40, %c0_41] : memref<128x128xf32, #tpu.memory_space<vmem>>, vector<128x128xf32>
    tpu.vector_store %arg7[%c0_40, %c0_41], %54 {strides = array<i32>} : memref<128x128xf32, #tpu.memory_space<vmem>>, vector<128x128xf32>,
    return
  }
  func.func @transform_0(%arg0: i32) -> (i32, i32) {
    %c0_i32 = arith.constant 0 : i32
    %c0_i32_0 = arith.constant 0 : i32
    return %arg0, %c0_i32 : i32, i32
  }
  func.func @transform_1(%arg0: i32) -> (i32, i32) {
    %c0_i32 = arith.constant 0 : i32
    %c0_i32_0 = arith.constant 0 : i32
    %c0_i32_1 = arith.constant 0 : i32
    return %c0_i32, %c0_i32_0 : i32, i32
  }
  func.func @transform_2(%arg0: i32) -> (i32, i32, i32) {
    %c0_i32 = arith.constant 0 : i32
    %c0_i32_0 = arith.constant 0 : i32
    %c0_i32_1 = arith.constant 0 : i32
    %c0_i32_2 = arith.constant 0 : i32
    return %c0_i32, %c0_i32_0, %c0_i32_1 : i32, i32, i32
  }
  func.func @transform_3(%arg0: i32) -> (i32, i32) {
    %c0_i32 = arith.constant 0 : i32
    %c0_i32_0 = arith.constant 0 : i32
    %c0_i32_1 = arith.constant 0 : i32
    return %c0_i32, %c0_i32_0 : i32, i32
  }
  func.func @transform_4(%arg0: i32) -> (i32, i32, i32) {
    %c0_i32 = arith.constant 0 : i32
    %c0_i32_0 = arith.constant 0 : i32
    %c0_i32_1 = arith.constant 0 : i32
    %c0_i32_2 = arith.constant 0 : i32
    return %c0_i32, %c0_i32_0, %c0_i32_1 : i32, i32, i32
  }
  func.func @transform_5(%arg0: i32) -> (i32, i32) {
    %c0_i32 = arith.constant 0 : i32
    %c0_i32_0 = arith.constant 0 : i32
    %c0_i32_1 = arith.constant 0 : i32
    return %c0_i32, %c0_i32_0 : i32, i32
  }
  func.func @transform_6(%arg0: i32) -> (i32, i32) {
    %c0_i32 = arith.constant 0 : i32
    %c0_i32_0 = arith.constant 0 : i32
    return %arg0, %c0_i32 : i32, i32
  }
}

</mosaic_0001>

<llo_original>
// kernel: defnet_forward.1
$region0: #{defnet_forward.1}
  #allocation0 [shape = 'u32[]', space=smem, size = 0x4, offset = 0x4, fixed_abs, tag = 'smem constant byte address 0x4 - core index']
  #allocation1 [shape = 'u32[144,128]{1,0:T(1,128)}', space=vmem, size = 0x12000, scoped, tag = 'internal scratch']
  %s0 = inlined_call_operand.vmem [shape: bf16[512,128], index: 0, kind: input, shape index: {}]
  %s1 = inlined_call_operand.vmem [shape: bf16[128,256], index: 1, kind: input, shape index: {}]
  %s2 = inlined_call_operand.vmem [shape: bf16[4,256,256], index: 2, kind: input, shape index: {}]
  %s3 = inlined_call_operand.vmem [shape: bf16[256,128], index: 3, kind: input, shape index: {}]
  %s4 = inlined_call_operand.vmem [shape: f32[5,1,256], index: 4, kind: input, shape index: {}]
  %s5 = inlined_call_operand.vmem [shape: f32[1,128], index: 5, kind: input, shape index: {}]
  %s6 = inlined_call_operand.vmem [shape: f32[512,128], index: 6, kind: output, shape index: {}]
  %s7 = sld [smem:[#allocation0]]
  $region57: #{defnet_forward.1} parent=0
    _
  %s9 = ssub.s32 1, %s7
  %s10 = scalar_select 0, %s9, %s7
  loop: start=0, step=1, limit=6
  $region2: #{defnet_forward.1} parent=0 // loop_pre_header
    _
  $region3: #{defnet_forward.1} parent=0 // loop_header
    %s12 = sphi 0, %s16
    %p13 = scmp.ge.s32.totalorder %s12, 6
    %s22 = sphi 0, %s24
    %s25 = sphi 0, %s22
    %s26 = sphi 0, %s25
    %s42 = sphi 0, %s26
    %s46 = sphi 0, %s46
    %s48 = sphi 0, %s46
    %s49 = sphi 0, %s48
    %s63 = sphi 0, %s49
    %s67 = sphi 0, %s67
    %s69 = sphi 0, %s67
    %s70 = sphi 0, %s69
    %s84 = sphi 0, %s70
    %s88 = sphi 0, %s88
    %s90 = sphi 0, %s88
    %s91 = sphi 0, %s90
    %s105 = sphi 0, %s91
    %s109 = sphi 0, %s109
    %s111 = sphi 0, %s109
    %s112 = sphi 0, %s111
    %s126 = sphi 0, %s112
    %s130 = sphi 0, %s130
    %s132 = sphi 0, %s130
    %s133 = sphi 0, %s132
    %s147 = sphi 0, %s133
    %s153 = sphi 0, %s155
    %s156 = sphi 0, %s153
    %s157 = sphi 0, %s156
    %s173 = sphi 0, %s157
  $region4: #{defnet_forward.1} parent=0 // loop_header_branch
    %15 = sbr.rel (%p13) target = $region8
  $region5: #{defnet_forward.1} parent=0 // loop_body
    %s17 = ssub.s32 %s12, 1
    %s18 = ssub.s32 %s12, 2
    %s19 = sadd.s32 %s12, 1
    %s20 = ssub.s32 %s12, %s19
    %p21 = scmp.eq.s32.totalorder %s20, 0
    %s23 = sadd.s32 %s22, 1
    %s24 = scalar_select %p21, %s22, %s23
    %p27 = pneg %p21
    %p28 = scmp.eq.s32.totalorder %s12, 3
    %p29 = por %p27, %p28
    %p30 = scmp.ne.s32.totalorder %s22, %s25
    %p31 = scmp.eq.s32.totalorder %s12, 0
    %p32 = por %p30, %p31
    %p33 = scmp.ne.s32.totalorder %s22, %s25
    %p34 = scmp.eq.s32.totalorder %s17, 3
    %p35 = por %p33, %p34
    %p36 = scmp.ne.s32.totalorder %s25, %s26
    %p37 = scmp.eq.s32.totalorder %s17, 0
    %p38 = por %p36, %p37
    %p39 = scmp.ne.s32.totalorder %s25, %s26
    %p40 = scmp.eq.s32.totalorder %s18, 3
    %p41 = por %p39, %p40
    %p43 = scmp.ne.s32.totalorder %s26, %s42
    %p44 = scmp.eq.s32.totalorder %s18, 0
    %p45 = por %p43, %p44
    %s47 = sadd.s32 %s46, 1
    %p50 = scmp.eq.s32.totalorder %s12, 3
    %p51 = scmp.ne.s32.totalorder %s46, %s48
    %p52 = scmp.eq.s32.totalorder %s12, 0
    %p53 = por %p51, %p52
    %p54 = scmp.ne.s32.totalorder %s46, %s48
    %p55 = scmp.eq.s32.totalorder %s17, 3
    %p56 = por %p54, %p55
    %p57 = scmp.ne.s32.totalorder %s48, %s49
    %p58 = scmp.eq.s32.totalorder %s17, 0
    %p59 = por %p57, %p58
    %p60 = scmp.ne.s32.totalorder %s48, %s49
    %p61 = scmp.eq.s32.totalorder %s18, 3
    %p62 = por %p60, %p61
    %p64 = scmp.ne.s32.totalorder %s49, %s63
    %p65 = scmp.eq.s32.totalorder %s18, 0
    %p66 = por %p64, %p65
    %s68 = sadd.s32 %s67, 1
    %p71 = scmp.eq.s32.totalorder %s12, 3
    %p72 = scmp.ne.s32.totalorder %s67, %s69
    %p73 = scmp.eq.s32.totalorder %s12, 0
    %p74 = por %p72, %p73
    %p75 = scmp.ne.s32.totalorder %s67, %s69
    %p76 = scmp.eq.s32.totalorder %s17, 3
    %p77 = por %p75, %p76
    %p78 = scmp.ne.s32.totalorder %s69, %s70
    %p79 = scmp.eq.s32.totalorder %s17, 0
    %p80 = por %p78, %p79
    %p81 = scmp.ne.s32.totalorder %s69, %s70
    %p82 = scmp.eq.s32.totalorder %s18, 3
    %p83 = por %p81, %p82
    %p85 = scmp.ne.s32.totalorder %s70, %s84
    %p86 = scmp.eq.s32.totalorder %s18, 0
    %p87 = por %p85, %p86
    %s89 = sadd.s32 %s88, 1
    %p92 = scmp.eq.s32.totalorder %s12, 3
    %p93 = scmp.ne.s32.totalorder %s88, %s90
    %p94 = scmp.eq.s32.totalorder %s12, 0
    %p95 = por %p93, %p94
    %p96 = scmp.ne.s32.totalorder %s88, %s90
    %p97 = scmp.eq.s32.totalorder %s17, 3
    %p98 = por %p96, %p97
    %p99 = scmp.ne.s32.totalorder %s90, %s91
    %p100 = scmp.eq.s32.totalorder %s17, 0
    %p101 = por %p99, %p100
    %p102 = scmp.ne.s32.totalorder %s90, %s91
    %p103 = scmp.eq.s32.totalorder %s18, 3
    %p104 = por %p102, %p103
    %p106 = scmp.ne.s32.totalorder %s91, %s105
    %p107 = scmp.eq.s32.totalorder %s18, 0
    %p108 = por %p106, %p107
    %s110 = sadd.s32 %s109, 1
    %p113 = scmp.eq.s32.totalorder %s12, 3
    %p114 = scmp.ne.s32.totalorder %s109, %s111
    %p115 = scmp.eq.s32.totalorder %s12, 0
    %p116 = por %p114, %p115
    %p117 = scmp.ne.s32.totalorder %s109, %s111
    %p118 = scmp.eq.s32.totalorder %s17, 3
    %p119 = por %p117, %p118
    %p120 = scmp.ne.s32.totalorder %s111, %s112
    %p121 = scmp.eq.s32.totalorder %s17, 0
    %p122 = por %p120, %p121
    %p123 = scmp.ne.s32.totalorder %s111, %s112
    %p124 = scmp.eq.s32.totalorder %s18, 3
    %p125 = por %p123, %p124
    %p127 = scmp.ne.s32.totalorder %s112, %s126
    %p128 = scmp.eq.s32.totalorder %s18, 0
    %p129 = por %p127, %p128
    %s131 = sadd.s32 %s130, 1
    %p134 = scmp.eq.s32.totalorder %s12, 3
    %p135 = scmp.ne.s32.totalorder %s130, %s132
    %p136 = scmp.eq.s32.totalorder %s12, 0
    %p137 = por %p135, %p136
    %p138 = scmp.ne.s32.totalorder %s130, %s132
    %p139 = scmp.eq.s32.totalorder %s17, 3
    %p140 = por %p138, %p139
    %p141 = scmp.ne.s32.totalorder %s132, %s133
    %p142 = scmp.eq.s32.totalorder %s17, 0
    %p143 = por %p141, %p142
    %p144 = scmp.ne.s32.totalorder %s132, %s133
    %p145 = scmp.eq.s32.totalorder %s18, 3
    %p146 = por %p144, %p145
    %p148 = scmp.ne.s32.totalorder %s133, %s147
    %p149 = scmp.eq.s32.totalorder %s18, 0
    %p150 = por %p148, %p149
    %s151 = ssub.s32 %s12, %s19
    %p152 = scmp.eq.s32.totalorder %s151, 0
    %s154 = sadd.s32 %s153, 1
    %s155 = scalar_select %p152, %s153, %s154
    %p158 = pneg %p152
    %p159 = scmp.eq.s32.totalorder %s12, 3
    %p160 = por %p158, %p159
    %p161 = scmp.ne.s32.totalorder %s153, %s156
    %p162 = scmp.eq.s32.totalorder %s12, 0
    %p163 = por %p161, %p162
    %p164 = scmp.ne.s32.totalorder %s153, %s156
    %p165 = scmp.eq.s32.totalorder %s17, 3
    %p166 = por %p164, %p165
    %p167 = scmp.ne.s32.totalorder %s156, %s157
    %p168 = scmp.eq.s32.totalorder %s17, 0
    %p169 = por %p167, %p168
    %p170 = scmp.ne.s32.totalorder %s156, %s157
    %p171 = scmp.eq.s32.totalorder %s18, 3
    %p172 = por %p170, %p171
    %p174 = scmp.ne.s32.totalorder %s157, %s173
    %p175 = scmp.eq.s32.totalorder %s18, 0
    %p176 = por %p174, %p175
    %p177 = scmp.le.s32.totalorder 1, %s12
    %p178 = scmp.lt.s32.totalorder %s12, 5
    %p179 = pnand %p177, %p178
    %p180 = pneg %p179
    // Predicated region
    $region9: #{defnet_forward.1} parent=5 // pred_check
      _
    $region10: #{defnet_forward.1} parent=5 // pred_check_branch
      %182 = sbr.rel (%p179) target = $region12
    $region11: #{defnet_forward.1} parent=5 // pred_region
      %s183 = ssub.s32 %s12, 1
      // Predicated region
      $region13: #{defnet_forward.1} parent=11 // pred_check
        %p184 = pneg %p59
      $region14: #{defnet_forward.1} parent=11 // pred_check_branch
        %186 = sbr.rel (%p184) target = $region16
      $region15: #{defnet_forward.1} parent=11 // pred_region
        _
      $region16: #{defnet_forward.1} parent=11 // pred_fallthru
        _
      // Predicated region
      $region17: #{defnet_forward.1} parent=11 // pred_check
        %p187 = pneg %p80
      $region18: #{defnet_forward.1} parent=11 // pred_check_branch
        %189 = sbr.rel (%p187) target = $region20
      $region19: #{defnet_forward.1} parent=11 // pred_region
        _
      $region20: #{defnet_forward.1} parent=11 // pred_fallthru
        _
      // Predicated region
      $region21: #{defnet_forward.1} parent=11 // pred_check
        %p190 = pneg %p101
      $region22: #{defnet_forward.1} parent=11 // pred_check_branch
        %192 = sbr.rel (%p190) target = $region24
      $region23: #{defnet_forward.1} parent=11 // pred_region
        _
      $region24: #{defnet_forward.1} parent=11 // pred_fallthru
        _
      // Predicated region
      $region25: #{defnet_forward.1} parent=11 // pred_check
        %p193 = pneg %p122
      $region26: #{defnet_forward.1} parent=11 // pred_check_branch
        %195 = sbr.rel (%p193) target = $region28
      $region27: #{defnet_forward.1} parent=11 // pred_region
        _
      $region28: #{defnet_forward.1} parent=11 // pred_fallthru
        _
      // Predicated region
      $region29: #{defnet_forward.1} parent=11 // pred_check
        %p196 = pneg %p143
      $region30: #{defnet_forward.1} parent=11 // pred_check_branch
        %198 = sbr.rel (%p196) target = $region32
      $region31: #{defnet_forward.1} parent=11 // pred_region
        _
      $region32: #{defnet_forward.1} parent=11 // pred_fallthru
        _
    $region12: #{defnet_forward.1} parent=5 // pred_fallthru
      _
    %p199 = scmp.lt.s32.totalorder %s12, 4
    // Predicated region
    $region33: #{defnet_forward.1} parent=5 // pred_check
      %p200 = pneg %p199
    $region34: #{defnet_forward.1} parent=5 // pred_check_branch
      %202 = sbr.rel (%p200) target = $region36
    $region35: #{defnet_forward.1} parent=5 // pred_region
      // Predicated region
      $region37: #{defnet_forward.1} parent=35 // pred_check
        %p203 = pneg %p32
      $region38: #{defnet_forward.1} parent=35 // pred_check_branch
        %205 = sbr.rel (%p203) target = $region40
      $region39: #{defnet_forward.1} parent=35 // pred_region
        %s206 = smul.u32 16, %s12
        %p207 = scmp.lt.s32.totalorder %s206, 63
        %s208 = scalar_select %p207, %s206, 63
        %s209 = smul.addr %s208, 4
        %s210 = scalar_lea.vmem %s0, %s209
        %s211 = smul.u32 16, %s12
      $region40: #{defnet_forward.1} parent=35 // pred_fallthru
        _
    $region36: #{defnet_forward.1} parent=5 // pred_fallthru
      _
    %p212 = scmp.le.s32.totalorder 1, %s12
    %p213 = scmp.lt.s32.totalorder %s12, 5
    %p214 = pnand %p212, %p213
    %p215 = pneg %p214
    // Predicated region
    $region41: #{defnet_forward.1} parent=5 // pred_check
      _
    $region42: #{defnet_forward.1} parent=5 // pred_check_branch
      %217 = sbr.rel (%p214) target = $region44
    $region43: #{defnet_forward.1} parent=5 // pred_region
      %s218 = ssub.s32 %s12, 1
      %s219 = smul.u32 16, %s17
      %p220 = scmp.lt.s32.totalorder %s219, 63
      %s221 = scalar_select %p220, %s219, 63
      %s222 = smul.addr %s221, 4
      %s223 = scalar_lea.vmem %s0, %s222
      %p224 = pneg %p38
      %p225 = pneg %p35
      %p226 = pneg %p59
      %p227 = pneg %p56
      %p228 = pneg %p80
      %p229 = pneg %p77
      %p230 = pneg %p101
      %p231 = pneg %p98
      %p232 = pneg %p122
      %p233 = pneg %p119
      %p234 = pneg %p143
      %p235 = pneg %p140
      %p236 = pneg %p169
      %p237 = pneg %p166
      %s238 = smul.u32 16, %s17
      %p239 = scmp.lt.s32.totalorder %s238, 63
      %s240 = scalar_select %p239, %s238, 63
      %s241 = smul.addr %s240, 8
      %s242 = scalar_lea.vmem %s6, %s241
      %s243 = smul.u32 16, %s17
      %p244 = scmp.lt.s32.totalorder %s243, 63
      %s245 = scalar_select %p244, %s243, 63
      %s246 = smul.addr %s245, 4
      %s247 = scalar_lea.vmem %s0, %s246
      %s248 = smul.u32 16, %s17
      %s249 = smul.u32 16, %s17
      %p250 = scmp.lt.s32.totalorder %s249, 63
      %s251 = scalar_select %p250, %s249, 63
      %s252 = smul.addr %s251, 8
      %s253 = scalar_lea.vmem %s6, %s252
      %s254 = smul.u32 16, %s17
      %v256 = vld [vmem:[%s247] sm:$0xf]
      %v257 = vld [vmem:[%s247 + $0x4] sm:$0xf]
      %v258 = vld [vmem:[%s247 + $0x8] sm:$0xf]
      %v259 = vld [vmem:[%s247 + $0xc] sm:$0xf]
      %v260 = vld [vmem:[%s247 + $0x10] sm:$0xf]
      %v261 = vld [vmem:[%s247 + $0x14] sm:$0xf]
      %v262 = vld [vmem:[%s247 + $0x18] sm:$0xf]
      %v263 = vld [vmem:[%s247 + $0x1c] sm:$0xf]
      %v264 = vld [vmem:[%s247 + $0x20] sm:$0xf]
      %v265 = vld [vmem:[%s247 + $0x24] sm:$0xf]
      %v266 = vld [vmem:[%s247 + $0x28] sm:$0xf]
      %v267 = vld [vmem:[%s247 + $0x2c] sm:$0xf]
      %v268 = vld [vmem:[%s247 + $0x30] sm:$0xf]
      %v269 = vld [vmem:[%s247 + $0x34] sm:$0xf]
      %v270 = vld [vmem:[%s247 + $0x38] sm:$0xf]
      %v271 = vld [vmem:[%s247 + $0x3c] sm:$0xf]
      %v272 = vld [vmem:[%s1] sm:$0xff]
      %v273 = vld [vmem:[%s1 + $0x8] sm:$0xff]
      %v274 = vld [vmem:[%s1 + $0x10] sm:$0xff]
      %v275 = vld [vmem:[%s1 + $0x18] sm:$0xff]
      %v276 = vld [vmem:[%s1 + $0x20] sm:$0xff]
      %v277 = vld [vmem:[%s1 + $0x28] sm:$0xff]
      %v278 = vld [vmem:[%s1 + $0x30] sm:$0xff]
      %v279 = vld [vmem:[%s1 + $0x38] sm:$0xff]
      %v280 = vld [vmem:[%s1 + $0x40] sm:$0xff]
      %v281 = vld [vmem:[%s1 + $0x48] sm:$0xff]
      %v282 = vld [vmem:[%s1 + $0x50] sm:$0xff]
      %v283 = vld [vmem:[%s1 + $0x58] sm:$0xff]
      %v284 = vld [vmem:[%s1 + $0x60] sm:$0xff]
      %v285 = vld [vmem:[%s1 + $0x68] sm:$0xff]
      %v286 = vld [vmem:[%s1 + $0x70] sm:$0xff]
      %v287 = vld [vmem:[%s1 + $0x78] sm:$0xff]
      %v288 = vld [vmem:[%s4] sm:$0x3]
      %v290 = vlaneseq
      %v291 = vshrl.u32 %v290, 7
      %v292 = vsub.s32 0, %v291
      %v293 = vrot.slane %v288, %v292
      %v294 = vlaneseq
      %v295 = vshrl.u32 %v294, 7
      %v296 = vsub.s32 1, %v295
      %v297 = vrot.slane %v288, %v296
      %v316 = vunpack.c.l.b16 %v256
      %v317 = vunpack.c.l.b16 %v257
      %v318 = vunpack.c.l.b16 %v258
      %v319 = vunpack.c.l.b16 %v259
      %v320 = vunpack.c.l.b16 %v260
      %v321 = vunpack.c.l.b16 %v261
      %v322 = vunpack.c.l.b16 %v262
      %v323 = vunpack.c.l.b16 %v263
      %v324 = vunpack.c.l.b16 %v264
      %v325 = vunpack.c.l.b16 %v265
      %v326 = vunpack.c.l.b16 %v266
      %v327 = vunpack.c.l.b16 %v267
      %v328 = vunpack.c.l.b16 %v268
      %v329 = vunpack.c.l.b16 %v269
      %v330 = vunpack.c.l.b16 %v270
      %v331 = vunpack.c.l.b16 %v271
      %v332 = vpack.c.b16 %v317, %v316
      %v333 = vpack.c.b16 %v319, %v318
      %v334 = vpack.c.b16 %v321, %v320
      %v335 = vpack.c.b16 %v323, %v322
      %v336 = vpack.c.b16 %v325, %v324
      %v337 = vpack.c.b16 %v327, %v326
      %v338 = vpack.c.b16 %v329, %v328
      %v339 = vpack.c.b16 %v331, %v330
      %v364 = vunpack.c.l.b16 %v272
      %v365 = vunpack.c.h.b16 %v272
      %v366 = vunpack.c.l.b16 %v273
      %v367 = vunpack.c.h.b16 %v273
      %v368 = vunpack.c.l.b16 %v274
      %v369 = vunpack.c.h.b16 %v274
      %v370 = vunpack.c.l.b16 %v275
      %v371 = vunpack.c.h.b16 %v275
      %v372 = vunpack.c.l.b16 %v276
      %v373 = vunpack.c.h.b16 %v276
      %v374 = vunpack.c.l.b16 %v277
      %v375 = vunpack.c.h.b16 %v277
      %v376 = vunpack.c.l.b16 %v278
      %v377 = vunpack.c.h.b16 %v278
      %v378 = vunpack.c.l.b16 %v279
      %v379 = vunpack.c.h.b16 %v279
      %v380 = vunpack.c.l.b16 %v280
      %v381 = vunpack.c.h.b16 %v280
      %v382 = vunpack.c.l.b16 %v281
      %v383 = vunpack.c.h.b16 %v281
      %v384 = vunpack.c.l.b16 %v282
      %v385 = vunpack.c.h.b16 %v282
      %v386 = vunpack.c.l.b16 %v283
      %v387 = vunpack.c.h.b16 %v283
      %v388 = vunpack.c.l.b16 %v284
      %v389 = vunpack.c.h.b16 %v284
      %v390 = vunpack.c.l.b16 %v285
      %v391 = vunpack.c.h.b16 %v285
      %v392 = vunpack.c.l.b16 %v286
      %v393 = vunpack.c.h.b16 %v286
      %v394 = vunpack.c.l.b16 %v287
      %v395 = vunpack.c.h.b16 %v287
      %v396 = vpack.c.b16 %v366, %v364
      %v397 = vpack.c.b16 %v367, %v365
      %v398 = vpack.c.b16 %v370, %v368
      %v399 = vpack.c.b16 %v371, %v369
      %v400 = vpack.c.b16 %v374, %v372
      %v401 = vpack.c.b16 %v375, %v373
      %v402 = vpack.c.b16 %v378, %v376
      %v403 = vpack.c.b16 %v379, %v377
      %v404 = vpack.c.b16 %v382, %v380
      %v405 = vpack.c.b16 %v383, %v381
      %v406 = vpack.c.b16 %v386, %v384
      %v407 = vpack.c.b16 %v387, %v385
      %v408 = vpack.c.b16 %v390, %v388
      %v409 = vpack.c.b16 %v391, %v389
      %v410 = vpack.c.b16 %v394, %v392
      %v411 = vpack.c.b16 %v395, %v393
      %428 = vmatprep.subr.bf16.mxu0 %v411
      %429 = vmatpush1.bf16.msra.mxu0 %v410
      %430 = vmatprep.subr.bf16.mxu0 %v409
      %431 = vmatpush1.bf16.msra.mxu0 %v408
      %432 = vmatprep.subr.bf16.mxu0 %v407
      %433 = vmatpush1.bf16.msra.mxu0 %v406
      %434 = vmatprep.subr.bf16.mxu0 %v405
      %435 = vmatpush1.bf16.msra.mxu0 %v404
      %436 = vmatprep.subr.bf16.mxu0 %v403
      %437 = vmatpush1.bf16.msra.mxu0 %v402
      %438 = vmatprep.subr.bf16.mxu0 %v401
      %439 = vmatpush1.bf16.msra.mxu0 %v400
      %440 = vmatprep.subr.bf16.mxu0 %v399
      %441 = vmatpush1.bf16.msra.mxu0 %v398
      %442 = vmatprep.subr.bf16.mxu0 %v397
      %443 = vmatpush1.bf16.msra.mxu0 %v396
      %444 = vmatprep.subr.bf16.mxu0 0
      %445 = vmatpush2.bf16.msra.mxu0 0
      %446 = vmatprep.subr.bf16.mxu0 0
      %447 = vmatpush2.bf16.msra.mxu0 0
      %448 = vmatprep.subr.bf16.mxu0 0
      %449 = vmatpush2.bf16.msra.mxu0 0
      %450 = vmatprep.subr.bf16.mxu0 0
      %451 = vmatpush2.bf16.msra.mxu0 0
      %452 = vmatprep.subr.bf16.mxu0 0
      %453 = vmatpush2.bf16.msra.mxu0 0
      %454 = vmatprep.subr.bf16.mxu0 0
      %455 = vmatpush2.bf16.msra.mxu0 0
      %456 = vmatprep.subr.bf16.mxu0 0
      %457 = vmatpush2.bf16.msra.mxu0 0
      %458 = vmatprep.subr.bf16.mxu0 0
      %459 = vmatpush2.bf16.msra.mxu0 0
      %460 = vmatprep.mubr.bf16.mxu0 0
      %461 = vmatmul.mubr.bf16.gmra.mxu0 %v332
      %v462 = vpop.f32.mrf.mxu0
      %v463 = vadd.f32 %v293, %v462
      %v464 = vpop.f32.mrf.mxu0
      %v465 = vadd.f32 %v297, %v464
      %v466 = vpop.f32.mrf.mxu0
      %v467 = vadd.f32 %v293, %v466
      %v468 = vpop.f32.mrf.mxu0
      %v469 = vadd.f32 %v297, %v468
      %470 = vmatprep.mubr.bf16.mxu0 0
      %471 = vmatmul.mubr.bf16.gmra.mxu0 %v333
      %v472 = vpop.f32.mrf.mxu0
      %v473 = vadd.f32 %v293, %v472
      %v474 = vpop.f32.mrf.mxu0
      %v475 = vadd.f32 %v297, %v474
      %v476 = vpop.f32.mrf.mxu0
      %v477 = vadd.f32 %v293, %v476
      %v478 = vpop.f32.mrf.mxu0
      %v479 = vadd.f32 %v297, %v478
      %480 = vmatprep.mubr.bf16.mxu0 0
      %481 = vmatmul.mubr.bf16.gmra.mxu0 %v334
      %v482 = vpop.f32.mrf.mxu0
      %v483 = vadd.f32 %v293, %v482
      %v484 = vpop.f32.mrf.mxu0
      %v485 = vadd.f32 %v297, %v484
      %v486 = vpop.f32.mrf.mxu0
      %v487 = vadd.f32 %v293, %v486
      %v488 = vpop.f32.mrf.mxu0
      %v489 = vadd.f32 %v297, %v488
      %490 = vmatprep.mubr.bf16.mxu0 0
      %491 = vmatmul.mubr.bf16.gmra.mxu0 %v335
      %v492 = vpop.f32.mrf.mxu0
      %v493 = vadd.f32 %v293, %v492
      %v494 = vpop.f32.mrf.mxu0
      %v495 = vadd.f32 %v297, %v494
      %v496 = vpop.f32.mrf.mxu0
      %v497 = vadd.f32 %v293, %v496
      %v498 = vpop.f32.mrf.mxu0
      %v499 = vadd.f32 %v297, %v498
      %500 = vmatprep.mubr.bf16.mxu0 0
      %501 = vmatmul.mubr.bf16.gmra.mxu0 %v336
      %v502 = vpop.f32.mrf.mxu0
      %v503 = vadd.f32 %v293, %v502
      %v504 = vpop.f32.mrf.mxu0
      %v505 = vadd.f32 %v297, %v504
      %v506 = vpop.f32.mrf.mxu0
      %v507 = vadd.f32 %v293, %v506
      %v508 = vpop.f32.mrf.mxu0
      %v509 = vadd.f32 %v297, %v508
      %510 = vmatprep.mubr.bf16.mxu0 0
      %511 = vmatmul.mubr.bf16.gmra.mxu0 %v337
      %v512 = vpop.f32.mrf.mxu0
      %v513 = vadd.f32 %v293, %v512
      %v514 = vpop.f32.mrf.mxu0
      %v515 = vadd.f32 %v297, %v514
      %v516 = vpop.f32.mrf.mxu0
      %v517 = vadd.f32 %v293, %v516
      %v518 = vpop.f32.mrf.mxu0
      %v519 = vadd.f32 %v297, %v518
      %520 = vmatprep.mubr.bf16.mxu0 0
      %521 = vmatmul.mubr.bf16.gmra.mxu0 %v338
      %v522 = vpop.f32.mrf.mxu0
      %v523 = vadd.f32 %v293, %v522
      %v524 = vpop.f32.mrf.mxu0
      %v525 = vadd.f32 %v297, %v524
      %v526 = vpop.f32.mrf.mxu0
      %v527 = vadd.f32 %v293, %v526
      %v528 = vpop.f32.mrf.mxu0
      %v529 = vadd.f32 %v297, %v528
      %530 = vmatprep.mubr.bf16.mxu0 0
      %531 = vmatmul.mubr.bf16.gmra.mxu0 %v339
      %v532 = vpop.f32.mrf.mxu0
      %v533 = vadd.f32 %v293, %v532
      %v534 = vpop.f32.mrf.mxu0
      %v535 = vadd.f32 %v297, %v534
      %v536 = vpop.f32.mrf.mxu0
      %v537 = vadd.f32 %v293, %v536
      %v538 = vpop.f32.mrf.mxu0
      %v539 = vadd.f32 %v297, %v538
      %540 = vdwg.mxu0
      %v541 = vmax.f32 %v463, 0.0
      %v542 = vmax.f32 %v465, 0.0
      %v543 = vmax.f32 %v467, 0.0
      %v544 = vmax.f32 %v469, 0.0
      %v545 = vmax.f32 %v473, 0.0
      %v546 = vmax.f32 %v475, 0.0
      %v547 = vmax.f32 %v477, 0.0
      %v548 = vmax.f32 %v479, 0.0
      %v549 = vmax.f32 %v483, 0.0
      %v550 = vmax.f32 %v485, 0.0
      %v551 = vmax.f32 %v487, 0.0
      %v552 = vmax.f32 %v489, 0.0
      %v553 = vmax.f32 %v493, 0.0
      %v554 = vmax.f32 %v495, 0.0
      %v555 = vmax.f32 %v497, 0.0
      %v556 = vmax.f32 %v499, 0.0
      %v557 = vmax.f32 %v503, 0.0
      %v558 = vmax.f32 %v505, 0.0
      %v559 = vmax.f32 %v507, 0.0
      %v560 = vmax.f32 %v509, 0.0
      %v561 = vmax.f32 %v513, 0.0
      %v562 = vmax.f32 %v515, 0.0
      %v563 = vmax.f32 %v517, 0.0
      %v564 = vmax.f32 %v519, 0.0
      %v565 = vmax.f32 %v523, 0.0
      %v566 = vmax.f32 %v525, 0.0
      %v567 = vmax.f32 %v527, 0.0
      %v568 = vmax.f32 %v529, 0.0
      %v569 = vmax.f32 %v533, 0.0
      %v570 = vmax.f32 %v535, 0.0
      %v571 = vmax.f32 %v537, 0.0
      %v572 = vmax.f32 %v539, 0.0
      %v573 = vpack.c.bf16 %v543, %v541
      %v574 = vpack.c.bf16 %v544, %v542
      %v575 = vpack.c.bf16 %v547, %v545
      %v576 = vpack.c.bf16 %v548, %v546
      %v577 = vpack.c.bf16 %v551, %v549
      %v578 = vpack.c.bf16 %v552, %v550
      %v579 = vpack.c.bf16 %v555, %v553
      %v580 = vpack.c.bf16 %v556, %v554
      %v581 = vpack.c.bf16 %v559, %v557
      %v582 = vpack.c.bf16 %v560, %v558
      %v583 = vpack.c.bf16 %v563, %v561
      %v584 = vpack.c.bf16 %v564, %v562
      %v585 = vpack.c.bf16 %v567, %v565
      %v586 = vpack.c.bf16 %v568, %v566
      %v587 = vpack.c.bf16 %v571, %v569
      %v588 = vpack.c.bf16 %v572, %v570
      %v589 = vld [vmem:[%s2] sm:$0xff]
      %v590 = vld [vmem:[%s2 + $0x8] sm:$0xff]
      %v591 = vld [vmem:[%s2 + $0x10] sm:$0xff]
      %v592 = vld [vmem:[%s2 + $0x18] sm:$0xff]
      %v593 = vld [vmem:[%s2 + $0x20] sm:$0xff]
      %v594 = vld [vmem:[%s2 + $0x28] sm:$0xff]
      %v595 = vld [vmem:[%s2 + $0x30] sm:$0xff]
      %v596 = vld [vmem:[%s2 + $0x38] sm:$0xff]
      %v597 = vld [vmem:[%s2 + $0x40] sm:$0xff]
      %v598 = vld [vmem:[%s2 + $0x48] sm:$0xff]
      %v599 = vld [vmem:[%s2 + $0x50] sm:$0xff]
      %v600 = vld [vmem:[%s2 + $0x58] sm:$0xff]
      %v601 = vld [vmem:[%s2 + $0x60] sm:$0xff]
      %v602 = vld [vmem:[%s2 + $0x68] sm:$0xff]
      %v603 = vld [vmem:[%s2 + $0x70] sm:$0xff]
      %v604 = vld [vmem:[%s2 + $0x78] sm:$0xff]
      %v605 = vld [vmem:[%s2 + $0x80] sm:$0xff]
      %v606 = vld [vmem:[%s2 + $0x88] sm:$0xff]
      %v607 = vld [vmem:[%s2 + $0x90] sm:$0xff]
      %v608 = vld [vmem:[%s2 + $0x98] sm:$0xff]
      %v609 = vld [vmem:[%s2 + $0xa0] sm:$0xff]
      %v610 = vld [vmem:[%s2 + $0xa8] sm:$0xff]
      %v611 = vld [vmem:[%s2 + $0xb0] sm:$0xff]
      %v612 = vld [vmem:[%s2 + $0xb8] sm:$0xff]
      %v613 = vld [vmem:[%s2 + $0xc0] sm:$0xff]
      %v614 = vld [vmem:[%s2 + $0xc8] sm:$0xff]
      %v615 = vld [vmem:[%s2 + $0xd0] sm:$0xff]
      %v616 = vld [vmem:[%s2 + $0xd8] sm:$0xff]
      %v617 = vld [vmem:[%s2 + $0xe0] sm:$0xff]
      %v618 = vld [vmem:[%s2 + $0xe8] sm:$0xff]
      %v619 = vld [vmem:[%s2 + $0xf0] sm:$0xff]
      %v620 = vld [vmem:[%s2 + $0xf8] sm:$0xff]
      %s621 = scalar_lea.vmem %s4, 2
      %v622 = vld [vmem:[%s621] sm:$0x3]
      %v624 = vlaneseq
      %v625 = vshrl.u32 %v624, 7
      %v626 = vsub.s32 0, %v625
      %v627 = vrot.slane %v622, %v626
      %v628 = vlaneseq
      %v629 = vshrl.u32 %v628, 7
      %v630 = vsub.s32 1, %v629
      %v631 = vrot.slane %v622, %v630
      %v666 = vunpack.c.l.b16 %v589
      %v667 = vunpack.c.h.b16 %v589
      %v668 = vunpack.c.l.b16 %v590
      %v669 = vunpack.c.h.b16 %v590
      %v670 = vunpack.c.l.b16 %v591
      %v671 = vunpack.c.h.b16 %v591
      %v672 = vunpack.c.l.b16 %v592
      %v673 = vunpack.c.h.b16 %v592
      %v674 = vunpack.c.l.b16 %v593
      %v675 = vunpack.c.h.b16 %v593
      %v676 = vunpack.c.l.b16 %v594
      %v677 = vunpack.c.h.b16 %v594
      %v678 = vunpack.c.l.b16 %v595
      %v679 = vunpack.c.h.b16 %v595
      %v680 = vunpack.c.l.b16 %v596
      %v681 = vunpack.c.h.b16 %v596
      %v682 = vunpack.c.l.b16 %v597
      %v683 = vunpack.c.h.b16 %v597
      %v684 = vunpack.c.l.b16 %v598
      %v685 = vunpack.c.h.b16 %v598
      %v686 = vunpack.c.l.b16 %v599
      %v687 = vunpack.c.h.b16 %v599
      %v688 = vunpack.c.l.b16 %v600
      %v689 = vunpack.c.h.b16 %v600
      %v690 = vunpack.c.l.b16 %v601
      %v691 = vunpack.c.h.b16 %v601
      %v692 = vunpack.c.l.b16 %v602
      %v693 = vunpack.c.h.b16 %v602
      %v694 = vunpack.c.l.b16 %v603
      %v695 = vunpack.c.h.b16 %v603
      %v696 = vunpack.c.l.b16 %v604
      %v697 = vunpack.c.h.b16 %v604
      %v698 = vunpack.c.l.b16 %v605
      %v699 = vunpack.c.h.b16 %v605
      %v700 = vunpack.c.l.b16 %v606
      %v701 = vunpack.c.h.b16 %v606
      %v702 = vunpack.c.l.b16 %v607
      %v703 = vunpack.c.h.b16 %v607
      %v704 = vunpack.c.l.b16 %v608
      %v705 = vunpack.c.h.b16 %v608
      %v706 = vunpack.c.l.b16 %v609
      %v707 = vunpack.c.h.b16 %v609
      %v708 = vunpack.c.l.b16 %v610
      %v709 = vunpack.c.h.b16 %v610
      %v710 = vunpack.c.l.b16 %v611
      %v711 = vunpack.c.h.b16 %v611
      %v712 = vunpack.c.l.b16 %v612
      %v713 = vunpack.c.h.b16 %v612
      %v714 = vunpack.c.l.b16 %v613
      %v715 = vunpack.c.h.b16 %v613
      %v716 = vunpack.c.l.b16 %v614
      %v717 = vunpack.c.h.b16 %v614
      %v718 = vunpack.c.l.b16 %v615
      %v719 = vunpack.c.h.b16 %v615
      %v720 = vunpack.c.l.b16 %v616
      %v721 = vunpack.c.h.b16 %v616
      %v722 = vunpack.c.l.b16 %v617
      %v723 = vunpack.c.h.b16 %v617
      %v724 = vunpack.c.l.b16 %v618
      %v725 = vunpack.c.h.b16 %v618
      %v726 = vunpack.c.l.b16 %v619
      %v727 = vunpack.c.h.b16 %v619
      %v728 = vunpack.c.l.b16 %v620
      %v729 = vunpack.c.h.b16 %v620
      %v730 = vpack.c.b16 %v668, %v666
      %v731 = vpack.c.b16 %v669, %v667
      %v732 = vpack.c.b16 %v672, %v670
      %v733 = vpack.c.b16 %v673, %v671
      %v734 = vpack.c.b16 %v676, %v674
      %v735 = vpack.c.b16 %v677, %v675
      %v736 = vpack.c.b16 %v680, %v678
      %v737 = vpack.c.b16 %v681, %v679
      %v738 = vpack.c.b16 %v684, %v682
      %v739 = vpack.c.b16 %v685, %v683
      %v740 = vpack.c.b16 %v688, %v686
      %v741 = vpack.c.b16 %v689, %v687
      %v742 = vpack.c.b16 %v692, %v690
      %v743 = vpack.c.b16 %v693, %v691
      %v744 = vpack.c.b16 %v696, %v694
      %v745 = vpack.c.b16 %v697, %v695
      %v746 = vpack.c.b16 %v700, %v698
      %v747 = vpack.c.b16 %v701, %v699
      %v748 = vpack.c.b16 %v704, %v702
      %v749 = vpack.c.b16 %v705, %v703
      %v750 = vpack.c.b16 %v708, %v706
      %v751 = vpack.c.b16 %v709, %v707
      %v752 = vpack.c.b16 %v712, %v710
      %v753 = vpack.c.b16 %v713, %v711
      %v754 = vpack.c.b16 %v716, %v714
      %v755 = vpack.c.b16 %v717, %v715
      %v756 = vpack.c.b16 %v720, %v718
      %v757 = vpack.c.b16 %v721, %v719
      %v758 = vpack.c.b16 %v724, %v722
      %v759 = vpack.c.b16 %v725, %v723
      %v760 = vpack.c.b16 %v728, %v726
      %v761 = vpack.c.b16 %v729, %v727
      %794 = vmatprep.subr.bf16.mxu0 %v745
      %795 = vmatpush1.bf16.msra.mxu0 %v744
      %796 = vmatprep.subr.bf16.mxu0 %v743
      %797 = vmatpush1.bf16.msra.mxu0 %v742
      %798 = vmatprep.subr.bf16.mxu0 %v741
      %799 = vmatpush1.bf16.msra.mxu0 %v740
      %800 = vmatprep.subr.bf16.mxu0 %v739
      %801 = vmatpush1.bf16.msra.mxu0 %v738
      %802 = vmatprep.subr.bf16.mxu0 %v737
      %803 = vmatpush1.bf16.msra.mxu0 %v736
      %804 = vmatprep.subr.bf16.mxu0 %v735
      %805 = vmatpush1.bf16.msra.mxu0 %v734
      %806 = vmatprep.subr.bf16.mxu0 %v733
      %807 = vmatpush1.bf16.msra.mxu0 %v732
      %808 = vmatprep.subr.bf16.mxu0 %v731
      %809 = vmatpush1.bf16.msra.mxu0 %v730
      %810 = vmatprep.subr.bf16.mxu0 %v761
      %811 = vmatpush2.bf16.msra.mxu0 %v760
      %812 = vmatprep.subr.bf16.mxu0 %v759
      %813 = vmatpush2.bf16.msra.mxu0 %v758
      %814 = vmatprep.subr.bf16.mxu0 %v757
      %815 = vmatpush2.bf16.msra.mxu0 %v756
      %816 = vmatprep.subr.bf16.mxu0 %v755
      %817 = vmatpush2.bf16.msra.mxu0 %v754
      %818 = vmatprep.subr.bf16.mxu0 %v753
      %819 = vmatpush2.bf16.msra.mxu0 %v752
      %820 = vmatprep.subr.bf16.mxu0 %v751
      %821 = vmatpush2.bf16.msra.mxu0 %v750
      %822 = vmatprep.subr.bf16.mxu0 %v749
      %823 = vmatpush2.bf16.msra.mxu0 %v748
      %824 = vmatprep.subr.bf16.mxu0 %v747
      %825 = vmatpush2.bf16.msra.mxu0 %v746
      %826 = vmatprep.mubr.bf16.mxu0 %v574
      %827 = vmatmul.mubr.bf16.gmra.mxu0 %v573
      %v828 = vpop.f32.mrf.mxu0
      %v829 = vadd.f32 %v627, %v828
      %v830 = vpop.f32.mrf.mxu0
      %v831 = vadd.f32 %v631, %v830
      %v832 = vpop.f32.mrf.mxu0
      %v833 = vadd.f32 %v627, %v832
      %v834 = vpop.f32.mrf.mxu0
      %v835 = vadd.f32 %v631, %v834
      %836 = vmatprep.mubr.bf16.mxu0 %v576
      %837 = vmatmul.mubr.bf16.gmra.mxu0 %v575
      %v838 = vpop.f32.mrf.mxu0
      %v839 = vadd.f32 %v627, %v838
      %v840 = vpop.f32.mrf.mxu0
      %v841 = vadd.f32 %v631, %v840
      %v842 = vpop.f32.mrf.mxu0
      %v843 = vadd.f32 %v627, %v842
      %v844 = vpop.f32.mrf.mxu0
      %v845 = vadd.f32 %v631, %v844
      %846 = vmatprep.mubr.bf16.mxu0 %v578
      %847 = vmatmul.mubr.bf16.gmra.mxu0 %v577
      %v848 = vpop.f32.mrf.mxu0
      %v849 = vadd.f32 %v627, %v848
      %v850 = vpop.f32.mrf.mxu0
      %v851 = vadd.f32 %v631, %v850
      %v852 = vpop.f32.mrf.mxu0
      %v853 = vadd.f32 %v627, %v852
      %v854 = vpop.f32.mrf.mxu0
      %v855 = vadd.f32 %v631, %v854
      %856 = vmatprep.mubr.bf16.mxu0 %v580
      %857 = vmatmul.mubr.bf16.gmra.mxu0 %v579
      %v858 = vpop.f32.mrf.mxu0
      %v859 = vadd.f32 %v627, %v858
      %v860 = vpop.f32.mrf.mxu0
      %v861 = vadd.f32 %v631, %v860
      %v862 = vpop.f32.mrf.mxu0
      %v863 = vadd.f32 %v627, %v862
      %v864 = vpop.f32.mrf.mxu0
      %v865 = vadd.f32 %v631, %v864
      %866 = vmatprep.mubr.bf16.mxu0 %v582
      %867 = vmatmul.mubr.bf16.gmra.mxu0 %v581
      %v868 = vpop.f32.mrf.mxu0
      %v869 = vadd.f32 %v627, %v868
      %v870 = vpop.f32.mrf.mxu0
      %v871 = vadd.f32 %v631, %v870
      %v872 = vpop.f32.mrf.mxu0
      %v873 = vadd.f32 %v627, %v872
      %v874 = vpop.f32.mrf.mxu0
      %v875 = vadd.f32 %v631, %v874
      %876 = vmatprep.mubr.bf16.mxu0 %v584
      %877 = vmatmul.mubr.bf16.gmra.mxu0 %v583
      %v878 = vpop.f32.mrf.mxu0
      %v879 = vadd.f32 %v627, %v878
      %v880 = vpop.f32.mrf.mxu0
      %v881 = vadd.f32 %v631, %v880
      %v882 = vpop.f32.mrf.mxu0
      %v883 = vadd.f32 %v627, %v882
      %v884 = vpop.f32.mrf.mxu0
      %v885 = vadd.f32 %v631, %v884
      %886 = vmatprep.mubr.bf16.mxu0 %v586
      %887 = vmatmul.mubr.bf16.gmra.mxu0 %v585
      %v888 = vpop.f32.mrf.mxu0
      %v889 = vadd.f32 %v627, %v888
      %v890 = vpop.f32.mrf.mxu0
      %v891 = vadd.f32 %v631, %v890
      %v892 = vpop.f32.mrf.mxu0
      %v893 = vadd.f32 %v627, %v892
      %v894 = vpop.f32.mrf.mxu0
      %v895 = vadd.f32 %v631, %v894
      %896 = vmatprep.mubr.bf16.mxu0 %v588
      %897 = vmatmul.mubr.bf16.gmra.mxu0 %v587
      %v898 = vpop.f32.mrf.mxu0
      %v899 = vadd.f32 %v627, %v898
      %v900 = vpop.f32.mrf.mxu0
      %v901 = vadd.f32 %v631, %v900
      %v902 = vpop.f32.mrf.mxu0
      %v903 = vadd.f32 %v627, %v902
      %v904 = vpop.f32.mrf.mxu0
      %v905 = vadd.f32 %v631, %v904
      %906 = vdwg.mxu0
      %v907 = vmax.f32 %v829, 0.0
      %v908 = vmax.f32 %v831, 0.0
      %v909 = vmax.f32 %v833, 0.0
      %v910 = vmax.f32 %v835, 0.0
      %v911 = vmax.f32 %v839, 0.0
      %v912 = vmax.f32 %v841, 0.0
      %v913 = vmax.f32 %v843, 0.0
      %v914 = vmax.f32 %v845, 0.0
      %v915 = vmax.f32 %v849, 0.0
      %v916 = vmax.f32 %v851, 0.0
      %v917 = vmax.f32 %v853, 0.0
      %v918 = vmax.f32 %v855, 0.0
      %v919 = vmax.f32 %v859, 0.0
      %v920 = vmax.f32 %v861, 0.0
      %v921 = vmax.f32 %v863, 0.0
      %v922 = vmax.f32 %v865, 0.0
      %v923 = vmax.f32 %v869, 0.0
      %v924 = vmax.f32 %v871, 0.0
      %v925 = vmax.f32 %v873, 0.0
      %v926 = vmax.f32 %v875, 0.0
      %v927 = vmax.f32 %v879, 0.0
      %v928 = vmax.f32 %v881, 0.0
      %v929 = vmax.f32 %v883, 0.0
      %v930 = vmax.f32 %v885, 0.0
      %v931 = vmax.f32 %v889, 0.0
      %v932 = vmax.f32 %v891, 0.0
      %v933 = vmax.f32 %v893, 0.0
      %v934 = vmax.f32 %v895, 0.0
      %v935 = vmax.f32 %v899, 0.0
      %v936 = vmax.f32 %v901, 0.0
      %v937 = vmax.f32 %v903, 0.0
      %v938 = vmax.f32 %v905, 0.0
      %v939 = vpack.c.bf16 %v909, %v907
      %v940 = vpack.c.bf16 %v910, %v908
      %v941 = vpack.c.bf16 %v913, %v911
      %v942 = vpack.c.bf16 %v914, %v912
      %v943 = vpack.c.bf16 %v917, %v915
      %v944 = vpack.c.bf16 %v918, %v916
      %v945 = vpack.c.bf16 %v921, %v919
      %v946 = vpack.c.bf16 %v922, %v920
      %v947 = vpack.c.bf16 %v925, %v923
      %v948 = vpack.c.bf16 %v926, %v924
      %v949 = vpack.c.bf16 %v929, %v927
      %v950 = vpack.c.bf16 %v930, %v928
      %v951 = vpack.c.bf16 %v933, %v931
      %v952 = vpack.c.bf16 %v934, %v932
      %v953 = vpack.c.bf16 %v937, %v935
      %v954 = vpack.c.bf16 %v938, %v936
      %s955 = scalar_lea.vmem %s2, 256
      %v956 = vld [vmem:[%s955] sm:$0xff]
      %v957 = vld [vmem:[%s955 + $0x8] sm:$0xff]
      %v958 = vld [vmem:[%s955 + $0x10] sm:$0xff]
      %v959 = vld [vmem:[%s955 + $0x18] sm:$0xff]
      %v960 = vld [vmem:[%s955 + $0x20] sm:$0xff]
      %v961 = vld [vmem:[%s955 + $0x28] sm:$0xff]
      %v962 = vld [vmem:[%s955 + $0x30] sm:$0xff]
      %v963 = vld [vmem:[%s955 + $0x38] sm:$0xff]
      %v964 = vld [vmem:[%s955 + $0x40] sm:$0xff]
      %v965 = vld [vmem:[%s955 + $0x48] sm:$0xff]
      %v966 = vld [vmem:[%s955 + $0x50] sm:$0xff]
      %v967 = vld [vmem:[%s955 + $0x58] sm:$0xff]
      %v968 = vld [vmem:[%s955 + $0x60] sm:$0xff]
      %v969 = vld [vmem:[%s955 + $0x68] sm:$0xff]
      %v970 = vld [vmem:[%s955 + $0x70] sm:$0xff]
      %v971 = vld [vmem:[%s955 + $0x78] sm:$0xff]
      %v972 = vld [vmem:[%s955 + $0x80] sm:$0xff]
      %v973 = vld [vmem:[%s955 + $0x88] sm:$0xff]
      %v974 = vld [vmem:[%s955 + $0x90] sm:$0xff]
      %v975 = vld [vmem:[%s955 + $0x98] sm:$0xff]
      %v976 = vld [vmem:[%s955 + $0xa0] sm:$0xff]
      %v977 = vld [vmem:[%s955 + $0xa8] sm:$0xff]
      %v978 = vld [vmem:[%s955 + $0xb0] sm:$0xff]
      %v979 = vld [vmem:[%s955 + $0xb8] sm:$0xff]
      %v980 = vld [vmem:[%s955 + $0xc0] sm:$0xff]
      %v981 = vld [vmem:[%s955 + $0xc8] sm:$0xff]
      %v982 = vld [vmem:[%s955 + $0xd0] sm:$0xff]
      %v983 = vld [vmem:[%s955 + $0xd8] sm:$0xff]
      %v984 = vld [vmem:[%s955 + $0xe0] sm:$0xff]
      %v985 = vld [vmem:[%s955 + $0xe8] sm:$0xff]
      %v986 = vld [vmem:[%s955 + $0xf0] sm:$0xff]
      %v987 = vld [vmem:[%s955 + $0xf8] sm:$0xff]
      %s988 = scalar_lea.vmem %s4, 4
      %v989 = vld [vmem:[%s988] sm:$0x3]
      %v991 = vlaneseq
      %v992 = vshrl.u32 %v991, 7
      %v993 = vsub.s32 0, %v992
      %v994 = vrot.slane %v989, %v993
      %v995 = vlaneseq
      %v996 = vshrl.u32 %v995, 7
      %v997 = vsub.s32 1, %v996
      %v998 = vrot.slane %v989, %v997
      %v1033 = vunpack.c.l.b16 %v956
      %v1034 = vunpack.c.h.b16 %v956
      %v1035 = vunpack.c.l.b16 %v957
      %v1036 = vunpack.c.h.b16 %v957
      %v1037 = vunpack.c.l.b16 %v958
      %v1038 = vunpack.c.h.b16 %v958
      %v1039 = vunpack.c.l.b16 %v959
      %v1040 = vunpack.c.h.b16 %v959
      %v1041 = vunpack.c.l.b16 %v960
      %v1042 = vunpack.c.h.b16 %v960
      %v1043 = vunpack.c.l.b16 %v961
      %v1044 = vunpack.c.h.b16 %v961
      %v1045 = vunpack.c.l.b16 %v962
      %v1046 = vunpack.c.h.b16 %v962
      %v1047 = vunpack.c.l.b16 %v963
      %v1048 = vunpack.c.h.b16 %v963
      %v1049 = vunpack.c.l.b16 %v964
      %v1050 = vunpack.c.h.b16 %v964
      %v1051 = vunpack.c.l.b16 %v965
      %v1052 = vunpack.c.h.b16 %v965
      %v1053 = vunpack.c.l.b16 %v966
      %v1054 = vunpack.c.h.b16 %v966
      %v1055 = vunpack.c.l.b16 %v967
      %v1056 = vunpack.c.h.b16 %v967
      %v1057 = vunpack.c.l.b16 %v968
      %v1058 = vunpack.c.h.b16 %v968
      %v1059 = vunpack.c.l.b16 %v969
      %v1060 = vunpack.c.h.b16 %v969
      %v1061 = vunpack.c.l.b16 %v970
      %v1062 = vunpack.c.h.b16 %v970
      %v1063 = vunpack.c.l.b16 %v971
      %v1064 = vunpack.c.h.b16 %v971
      %v1065 = vunpack.c.l.b16 %v972
      %v1066 = vunpack.c.h.b16 %v972
      %v1067 = vunpack.c.l.b16 %v973
      %v1068 = vunpack.c.h.b16 %v973
      %v1069 = vunpack.c.l.b16 %v974
      %v1070 = vunpack.c.h.b16 %v974
      %v1071 = vunpack.c.l.b16 %v975
      %v1072 = vunpack.c.h.b16 %v975
      %v1073 = vunpack.c.l.b16 %v976
      %v1074 = vunpack.c.h.b16 %v976
      %v1075 = vunpack.c.l.b16 %v977
      %v1076 = vunpack.c.h.b16 %v977
      %v1077 = vunpack.c.l.b16 %v978
      %v1078 = vunpack.c.h.b16 %v978
      %v1079 = vunpack.c.l.b16 %v979
      %v1080 = vunpack.c.h.b16 %v979
      %v1081 = vunpack.c.l.b16 %v980
      %v1082 = vunpack.c.h.b16 %v980
      %v1083 = vunpack.c.l.b16 %v981
      %v1084 = vunpack.c.h.b16 %v981
      %v1085 = vunpack.c.l.b16 %v982
      %v1086 = vunpack.c.h.b16 %v982
      %v1087 = vunpack.c.l.b16 %v983
      %v1088 = vunpack.c.h.b16 %v983
      %v1089 = vunpack.c.l.b16 %v984
      %v1090 = vunpack.c.h.b16 %v984
      %v1091 = vunpack.c.l.b16 %v985
      %v1092 = vunpack.c.h.b16 %v985
      %v1093 = vunpack.c.l.b16 %v986
      %v1094 = vunpack.c.h.b16 %v986
      %v1095 = vunpack.c.l.b16 %v987
      %v1096 = vunpack.c.h.b16 %v987
      %v1097 = vpack.c.b16 %v1035, %v1033
      %v1098 = vpack.c.b16 %v1036, %v1034
      %v1099 = vpack.c.b16 %v1039, %v1037
      %v1100 = vpack.c.b16 %v1040, %v1038
      %v1101 = vpack.c.b16 %v1043, %v1041
      %v1102 = vpack.c.b16 %v1044, %v1042
      %v1103 = vpack.c.b16 %v1047, %v1045
      %v1104 = vpack.c.b16 %v1048, %v1046
      %v1105 = vpack.c.b16 %v1051, %v1049
      %v1106 = vpack.c.b16 %v1052, %v1050
      %v1107 = vpack.c.b16 %v1055, %v1053
      %v1108 = vpack.c.b16 %v1056, %v1054
      %v1109 = vpack.c.b16 %v1059, %v1057
      %v1110 = vpack.c.b16 %v1060, %v1058
      %v1111 = vpack.c.b16 %v1063, %v1061
      %v1112 = vpack.c.b16 %v1064, %v1062
      %v1113 = vpack.c.b16 %v1067, %v1065
      %v1114 = vpack.c.b16 %v1068, %v1066
      %v1115 = vpack.c.b16 %v1071, %v1069
      %v1116 = vpack.c.b16 %v1072, %v1070
      %v1117 = vpack.c.b16 %v1075, %v1073
      %v1118 = vpack.c.b16 %v1076, %v1074
      %v1119 = vpack.c.b16 %v1079, %v1077
      %v1120 = vpack.c.b16 %v1080, %v1078
      %v1121 = vpack.c.b16 %v1083, %v1081
      %v1122 = vpack.c.b16 %v1084, %v1082
      %v1123 = vpack.c.b16 %v1087, %v1085
      %v1124 = vpack.c.b16 %v1088, %v1086
      %v1125 = vpack.c.b16 %v1091, %v1089
      %v1126 = vpack.c.b16 %v1092, %v1090
      %v1127 = vpack.c.b16 %v1095, %v1093
      %v1128 = vpack.c.b16 %v1096, %v1094
      %1161 = vmatprep.subr.bf16.mxu0 %v1112
      %1162 = vmatpush1.bf16.msra.mxu0 %v1111
      %1163 = vmatprep.subr.bf16.mxu0 %v1110
      %1164 = vmatpush1.bf16.msra.mxu0 %v1109
      %1165 = vmatprep.subr.bf16.mxu0 %v1108
      %1166 = vmatpush1.bf16.msra.mxu0 %v1107
      %1167 = vmatprep.subr.bf16.mxu0 %v1106
      %1168 = vmatpush1.bf16.msra.mxu0 %v1105
      %1169 = vmatprep.subr.bf16.mxu0 %v1104
      %1170 = vmatpush1.bf16.msra.mxu0 %v1103
      %1171 = vmatprep.subr.bf16.mxu0 %v1102
      %1172 = vmatpush1.bf16.msra.mxu0 %v1101
      %1173 = vmatprep.subr.bf16.mxu0 %v1100
      %1174 = vmatpush1.bf16.msra.mxu0 %v1099
      %1175 = vmatprep.subr.bf16.mxu0 %v1098
      %1176 = vmatpush1.bf16.msra.mxu0 %v1097
      %1177 = vmatprep.subr.bf16.mxu0 %v1128
      %1178 = vmatpush2.bf16.msra.mxu0 %v1127
      %1179 = vmatprep.subr.bf16.mxu0 %v1126
      %1180 = vmatpush2.bf16.msra.mxu0 %v1125
      %1181 = vmatprep.subr.bf16.mxu0 %v1124
      %1182 = vmatpush2.bf16.msra.mxu0 %v1123
      %1183 = vmatprep.subr.bf16.mxu0 %v1122
      %1184 = vmatpush2.bf16.msra.mxu0 %v1121
      %1185 = vmatprep.subr.bf16.mxu0 %v1120
      %1186 = vmatpush2.bf16.msra.mxu0 %v1119
      %1187 = vmatprep.subr.bf16.mxu0 %v1118
      %1188 = vmatpush2.bf16.msra.mxu0 %v1117
      %1189 = vmatprep.subr.bf16.mxu0 %v1116
      %1190 = vmatpush2.bf16.msra.mxu0 %v1115
      %1191 = vmatprep.subr.bf16.mxu0 %v1114
      %1192 = vmatpush2.bf16.msra.mxu0 %v1113
      %1193 = vmatprep.mubr.bf16.mxu0 %v940
      %1194 = vmatmul.mubr.bf16.gmra.mxu0 %v939
      %v1195 = vpop.f32.mrf.mxu0
      %v1196 = vadd.f32 %v994, %v1195
      %v1197 = vpop.f32.mrf.mxu0
      %v1198 = vadd.f32 %v998, %v1197
      %v1199 = vpop.f32.mrf.mxu0
      %v1200 = vadd.f32 %v994, %v1199
      %v1201 = vpop.f32.mrf.mxu0
      %v1202 = vadd.f32 %v998, %v1201
      %1203 = vmatprep.mubr.bf16.mxu0 %v942
      %1204 = vmatmul.mubr.bf16.gmra.mxu0 %v941
      %v1205 = vpop.f32.mrf.mxu0
      %v1206 = vadd.f32 %v994, %v1205
      %v1207 = vpop.f32.mrf.mxu0
      %v1208 = vadd.f32 %v998, %v1207
      %v1209 = vpop.f32.mrf.mxu0
      %v1210 = vadd.f32 %v994, %v1209
      %v1211 = vpop.f32.mrf.mxu0
      %v1212 = vadd.f32 %v998, %v1211
      %1213 = vmatprep.mubr.bf16.mxu0 %v944
      %1214 = vmatmul.mubr.bf16.gmra.mxu0 %v943
      %v1215 = vpop.f32.mrf.mxu0
      %v1216 = vadd.f32 %v994, %v1215
      %v1217 = vpop.f32.mrf.mxu0
      %v1218 = vadd.f32 %v998, %v1217
      %v1219 = vpop.f32.mrf.mxu0
      %v1220 = vadd.f32 %v994, %v1219
      %v1221 = vpop.f32.mrf.mxu0
      %v1222 = vadd.f32 %v998, %v1221
      %1223 = vmatprep.mubr.bf16.mxu0 %v946
      %1224 = vmatmul.mubr.bf16.gmra.mxu0 %v945
      %v1225 = vpop.f32.mrf.mxu0
      %v1226 = vadd.f32 %v994, %v1225
      %v1227 = vpop.f32.mrf.mxu0
      %v1228 = vadd.f32 %v998, %v1227
      %v1229 = vpop.f32.mrf.mxu0
      %v1230 = vadd.f32 %v994, %v1229
      %v1231 = vpop.f32.mrf.mxu0
      %v1232 = vadd.f32 %v998, %v1231
      %1233 = vmatprep.mubr.bf16.mxu0 %v948
      %1234 = vmatmul.mubr.bf16.gmra.mxu0 %v947
      %v1235 = vpop.f32.mrf.mxu0
      %v1236 = vadd.f32 %v994, %v1235
      %v1237 = vpop.f32.mrf.mxu0
      %v1238 = vadd.f32 %v998, %v1237
      %v1239 = vpop.f32.mrf.mxu0
      %v1240 = vadd.f32 %v994, %v1239
      %v1241 = vpop.f32.mrf.mxu0
      %v1242 = vadd.f32 %v998, %v1241
      %1243 = vmatprep.mubr.bf16.mxu0 %v950
      %1244 = vmatmul.mubr.bf16.gmra.mxu0 %v949
      %v1245 = vpop.f32.mrf.mxu0
      %v1246 = vadd.f32 %v994, %v1245
      %v1247 = vpop.f32.mrf.mxu0
      %v1248 = vadd.f32 %v998, %v1247
      %v1249 = vpop.f32.mrf.mxu0
      %v1250 = vadd.f32 %v994, %v1249
      %v1251 = vpop.f32.mrf.mxu0
      %v1252 = vadd.f32 %v998, %v1251
      %1253 = vmatprep.mubr.bf16.mxu0 %v952
      %1254 = vmatmul.mubr.bf16.gmra.mxu0 %v951
      %v1255 = vpop.f32.mrf.mxu0
      %v1256 = vadd.f32 %v994, %v1255
      %v1257 = vpop.f32.mrf.mxu0
      %v1258 = vadd.f32 %v998, %v1257
      %v1259 = vpop.f32.mrf.mxu0
      %v1260 = vadd.f32 %v994, %v1259
      %v1261 = vpop.f32.mrf.mxu0
      %v1262 = vadd.f32 %v998, %v1261
      %1263 = vmatprep.mubr.bf16.mxu0 %v954
      %1264 = vmatmul.mubr.bf16.gmra.mxu0 %v953
      %v1265 = vpop.f32.mrf.mxu0
      %v1266 = vadd.f32 %v994, %v1265
      %v1267 = vpop.f32.mrf.mxu0
      %v1268 = vadd.f32 %v998, %v1267
      %v1269 = vpop.f32.mrf.mxu0
      %v1270 = vadd.f32 %v994, %v1269
      %v1271 = vpop.f32.mrf.mxu0
      %v1272 = vadd.f32 %v998, %v1271
      %1273 = vdwg.mxu0
      %v1274 = vmax.f32 %v1196, 0.0
      %v1275 = vmax.f32 %v1198, 0.0
      %v1276 = vmax.f32 %v1200, 0.0
      %v1277 = vmax.f32 %v1202, 0.0
      %v1278 = vmax.f32 %v1206, 0.0
      %v1279 = vmax.f32 %v1208, 0.0
      %v1280 = vmax.f32 %v1210, 0.0
      %v1281 = vmax.f32 %v1212, 0.0
      %v1282 = vmax.f32 %v1216, 0.0
      %v1283 = vmax.f32 %v1218, 0.0
      %v1284 = vmax.f32 %v1220, 0.0
      %v1285 = vmax.f32 %v1222, 0.0
      %v1286 = vmax.f32 %v1226, 0.0
      %v1287 = vmax.f32 %v1228, 0.0
      %v1288 = vmax.f32 %v1230, 0.0
      %v1289 = vmax.f32 %v1232, 0.0
      %v1290 = vmax.f32 %v1236, 0.0
      %v1291 = vmax.f32 %v1238, 0.0
      %v1292 = vmax.f32 %v1240, 0.0
      %v1293 = vmax.f32 %v1242, 0.0
      %v1294 = vmax.f32 %v1246, 0.0
      %v1295 = vmax.f32 %v1248, 0.0
      %v1296 = vmax.f32 %v1250, 0.0
      %v1297 = vmax.f32 %v1252, 0.0
      %v1298 = vmax.f32 %v1256, 0.0
      %v1299 = vmax.f32 %v1258, 0.0
      %v1300 = vmax.f32 %v1260, 0.0
      %v1301 = vmax.f32 %v1262, 0.0
      %v1302 = vmax.f32 %v1266, 0.0
      %v1303 = vmax.f32 %v1268, 0.0
      %v1304 = vmax.f32 %v1270, 0.0
      %v1305 = vmax.f32 %v1272, 0.0
      %v1306 = vpack.c.bf16 %v1276, %v1274
      %v1307 = vpack.c.bf16 %v1277, %v1275
      %v1308 = vpack.c.bf16 %v1280, %v1278
      %v1309 = vpack.c.bf16 %v1281, %v1279
      %v1310 = vpack.c.bf16 %v1284, %v1282
      %v1311 = vpack.c.bf16 %v1285, %v1283
      %v1312 = vpack.c.bf16 %v1288, %v1286
      %v1313 = vpack.c.bf16 %v1289, %v1287
      %v1314 = vpack.c.bf16 %v1292, %v1290
      %v1315 = vpack.c.bf16 %v1293, %v1291
      %v1316 = vpack.c.bf16 %v1296, %v1294
      %v1317 = vpack.c.bf16 %v1297, %v1295
      %v1318 = vpack.c.bf16 %v1300, %v1298
      %v1319 = vpack.c.bf16 %v1301, %v1299
      %v1320 = vpack.c.bf16 %v1304, %v1302
      %v1321 = vpack.c.bf16 %v1305, %v1303
      %s1322 = scalar_lea.vmem %s2, 512
      %v1323 = vld [vmem:[%s1322] sm:$0xff]
      %v1324 = vld [vmem:[%s1322 + $0x8] sm:$0xff]
      %v1325 = vld [vmem:[%s1322 + $0x10] sm:$0xff]
      %v1326 = vld [vmem:[%s1322 + $0x18] sm:$0xff]
      %v1327 = vld [vmem:[%s1322 + $0x20] sm:$0xff]
      %v1328 = vld [vmem:[%s1322 + $0x28] sm:$0xff]
      %v1329 = vld [vmem:[%s1322 + $0x30] sm:$0xff]
      %v1330 = vld [vmem:[%s1322 + $0x38] sm:$0xff]
      %v1331 = vld [vmem:[%s1322 + $0x40] sm:$0xff]
      %v1332 = vld [vmem:[%s1322 + $0x48] sm:$0xff]
      %v1333 = vld [vmem:[%s1322 + $0x50] sm:$0xff]
      %v1334 = vld [vmem:[%s1322 + $0x58] sm:$0xff]
      %v1335 = vld [vmem:[%s1322 + $0x60] sm:$0xff]
      %v1336 = vld [vmem:[%s1322 + $0x68] sm:$0xff]
      %v1337 = vld [vmem:[%s1322 + $0x70] sm:$0xff]
      %v1338 = vld [vmem:[%s1322 + $0x78] sm:$0xff]
      %v1339 = vld [vmem:[%s1322 + $0x80] sm:$0xff]
      %v1340 = vld [vmem:[%s1322 + $0x88] sm:$0xff]
      %v1341 = vld [vmem:[%s1322 + $0x90] sm:$0xff]
      %v1342 = vld [vmem:[%s1322 + $0x98] sm:$0xff]
      %v1343 = vld [vmem:[%s1322 + $0xa0] sm:$0xff]
      %v1344 = vld [vmem:[%s1322 + $0xa8] sm:$0xff]
      %v1345 = vld [vmem:[%s1322 + $0xb0] sm:$0xff]
      %v1346 = vld [vmem:[%s1322 + $0xb8] sm:$0xff]
      %v1347 = vld [vmem:[%s1322 + $0xc0] sm:$0xff]
      %v1348 = vld [vmem:[%s1322 + $0xc8] sm:$0xff]
      %v1349 = vld [vmem:[%s1322 + $0xd0] sm:$0xff]
      %v1350 = vld [vmem:[%s1322 + $0xd8] sm:$0xff]
      %v1351 = vld [vmem:[%s1322 + $0xe0] sm:$0xff]
      %v1352 = vld [vmem:[%s1322 + $0xe8] sm:$0xff]
      %v1353 = vld [vmem:[%s1322 + $0xf0] sm:$0xff]
      %v1354 = vld [vmem:[%s1322 + $0xf8] sm:$0xff]
      %s1355 = scalar_lea.vmem %s4, 6
      %v1356 = vld [vmem:[%s1355] sm:$0x3]
      %v1358 = vlaneseq
      %v1359 = vshrl.u32 %v1358, 7
      %v1360 = vsub.s32 0, %v1359
      %v1361 = vrot.slane %v1356, %v1360
      %v1362 = vlaneseq
      %v1363 = vshrl.u32 %v1362, 7
      %v1364 = vsub.s32 1, %v1363
      %v1365 = vrot.slane %v1356, %v1364
      %v1400 = vunpack.c.l.b16 %v1323
      %v1401 = vunpack.c.h.b16 %v1323
      %v1402 = vunpack.c.l.b16 %v1324
      %v1403 = vunpack.c.h.b16 %v1324
      %v1404 = vunpack.c.l.b16 %v1325
      %v1405 = vunpack.c.h.b16 %v1325
      %v1406 = vunpack.c.l.b16 %v1326
      %v1407 = vunpack.c.h.b16 %v1326
      %v1408 = vunpack.c.l.b16 %v1327
      %v1409 = vunpack.c.h.b16 %v1327
      %v1410 = vunpack.c.l.b16 %v1328
      %v1411 = vunpack.c.h.b16 %v1328
      %v1412 = vunpack.c.l.b16 %v1329
      %v1413 = vunpack.c.h.b16 %v1329
      %v1414 = vunpack.c.l.b16 %v1330
      %v1415 = vunpack.c.h.b16 %v1330
      %v1416 = vunpack.c.l.b16 %v1331
      %v1417 = vunpack.c.h.b16 %v1331
      %v1418 = vunpack.c.l.b16 %v1332
      %v1419 = vunpack.c.h.b16 %v1332
      %v1420 = vunpack.c.l.b16 %v1333
      %v1421 = vunpack.c.h.b16 %v1333
      %v1422 = vunpack.c.l.b16 %v1334
      %v1423 = vunpack.c.h.b16 %v1334
      %v1424 = vunpack.c.l.b16 %v1335
      %v1425 = vunpack.c.h.b16 %v1335
      %v1426 = vunpack.c.l.b16 %v1336
      %v1427 = vunpack.c.h.b16 %v1336
      %v1428 = vunpack.c.l.b16 %v1337
      %v1429 = vunpack.c.h.b16 %v1337
      %v1430 = vunpack.c.l.b16 %v1338
      %v1431 = vunpack.c.h.b16 %v1338
      %v1432 = vunpack.c.l.b16 %v1339
      %v1433 = vunpack.c.h.b16 %v1339
      %v1434 = vunpack.c.l.b16 %v1340
      %v1435 = vunpack.c.h.b16 %v1340
      %v1436 = vunpack.c.l.b16 %v1341
      %v1437 = vunpack.c.h.b16 %v1341
      %v1438 = vunpack.c.l.b16 %v1342
      %v1439 = vunpack.c.h.b16 %v1342
      %v1440 = vunpack.c.l.b16 %v1343
      %v1441 = vunpack.c.h.b16 %v1343
      %v1442 = vunpack.c.l.b16 %v1344
      %v1443 = vunpack.c.h.b16 %v1344
      %v1444 = vunpack.c.l.b16 %v1345
      %v1445 = vunpack.c.h.b16 %v1345
      %v1446 = vunpack.c.l.b16 %v1346
      %v1447 = vunpack.c.h.b16 %v1346
      %v1448 = vunpack.c.l.b16 %v1347
      %v1449 = vunpack.c.h.b16 %v1347
      %v1450 = vunpack.c.l.b16 %v1348
      %v1451 = vunpack.c.h.b16 %v1348
      %v1452 = vunpack.c.l.b16 %v1349
      %v1453 = vunpack.c.h.b16 %v1349
      %v1454 = vunpack.c.l.b16 %v1350
      %v1455 = vunpack.c.h.b16 %v1350
      %v1456 = vunpack.c.l.b16 %v1351
      %v1457 = vunpack.c.h.b16 %v1351
      %v1458 = vunpack.c.l.b16 %v1352
      %v1459 = vunpack.c.h.b16 %v1352
      %v1460 = vunpack.c.l.b16 %v1353
      %v1461 = vunpack.c.h.b16 %v1353
      %v1462 = vunpack.c.l.b16 %v1354
      %v1463 = vunpack.c.h.b16 %v1354
      %v1464 = vpack.c.b16 %v1402, %v1400
      %v1465 = vpack.c.b16 %v1403, %v1401
      %v1466 = vpack.c.b16 %v1406, %v1404
      %v1467 = vpack.c.b16 %v1407, %v1405
      %v1468 = vpack.c.b16 %v1410, %v1408
      %v1469 = vpack.c.b16 %v1411, %v1409
      %v1470 = vpack.c.b16 %v1414, %v1412
      %v1471 = vpack.c.b16 %v1415, %v1413
      %v1472 = vpack.c.b16 %v1418, %v1416
      %v1473 = vpack.c.b16 %v1419, %v1417
      %v1474 = vpack.c.b16 %v1422, %v1420
      %v1475 = vpack.c.b16 %v1423, %v1421
      %v1476 = vpack.c.b16 %v1426, %v1424
      %v1477 = vpack.c.b16 %v1427, %v1425
      %v1478 = vpack.c.b16 %v1430, %v1428
      %v1479 = vpack.c.b16 %v1431, %v1429
      %v1480 = vpack.c.b16 %v1434, %v1432
      %v1481 = vpack.c.b16 %v1435, %v1433
      %v1482 = vpack.c.b16 %v1438, %v1436
      %v1483 = vpack.c.b16 %v1439, %v1437
      %v1484 = vpack.c.b16 %v1442, %v1440
      %v1485 = vpack.c.b16 %v1443, %v1441
      %v1486 = vpack.c.b16 %v1446, %v1444
      %v1487 = vpack.c.b16 %v1447, %v1445
      %v1488 = vpack.c.b16 %v1450, %v1448
      %v1489 = vpack.c.b16 %v1451, %v1449
      %v1490 = vpack.c.b16 %v1454, %v1452
      %v1491 = vpack.c.b16 %v1455, %v1453
      %v1492 = vpack.c.b16 %v1458, %v1456
      %v1493 = vpack.c.b16 %v1459, %v1457
      %v1494 = vpack.c.b16 %v1462, %v1460
      %v1495 = vpack.c.b16 %v1463, %v1461
      %1528 = vmatprep.subr.bf16.mxu0 %v1479
      %1529 = vmatpush1.bf16.msra.mxu0 %v1478
      %1530 = vmatprep.subr.bf16.mxu0 %v1477
      %1531 = vmatpush1.bf16.msra.mxu0 %v1476
      %1532 = vmatprep.subr.bf16.mxu0 %v1475
      %1533 = vmatpush1.bf16.msra.mxu0 %v1474
      %1534 = vmatprep.subr.bf16.mxu0 %v1473
      %1535 = vmatpush1.bf16.msra.mxu0 %v1472
      %1536 = vmatprep.subr.bf16.mxu0 %v1471
      %1537 = vmatpush1.bf16.msra.mxu0 %v1470
      %1538 = vmatprep.subr.bf16.mxu0 %v1469
      %1539 = vmatpush1.bf16.msra.mxu0 %v1468
      %1540 = vmatprep.subr.bf16.mxu0 %v1467
      %1541 = vmatpush1.bf16.msra.mxu0 %v1466
      %1542 = vmatprep.subr.bf16.mxu0 %v1465
      %1543 = vmatpush1.bf16.msra.mxu0 %v1464
      %1544 = vmatprep.subr.bf16.mxu0 %v1495
      %1545 = vmatpush2.bf16.msra.mxu0 %v1494
      %1546 = vmatprep.subr.bf16.mxu0 %v1493
      %1547 = vmatpush2.bf16.msra.mxu0 %v1492
      %1548 = vmatprep.subr.bf16.mxu0 %v1491
      %1549 = vmatpush2.bf16.msra.mxu0 %v1490
      %1550 = vmatprep.subr.bf16.mxu0 %v1489
      %1551 = vmatpush2.bf16.msra.mxu0 %v1488
      %1552 = vmatprep.subr.bf16.mxu0 %v1487
      %1553 = vmatpush2.bf16.msra.mxu0 %v1486
      %1554 = vmatprep.subr.bf16.mxu0 %v1485
      %1555 = vmatpush2.bf16.msra.mxu0 %v1484
      %1556 = vmatprep.subr.bf16.mxu0 %v1483
      %1557 = vmatpush2.bf16.msra.mxu0 %v1482
      %1558 = vmatprep.subr.bf16.mxu0 %v1481
      %1559 = vmatpush2.bf16.msra.mxu0 %v1480
      %1560 = vmatprep.mubr.bf16.mxu0 %v1307
      %1561 = vmatmul.mubr.bf16.gmra.mxu0 %v1306
      %v1562 = vpop.f32.mrf.mxu0
      %v1563 = vadd.f32 %v1361, %v1562
      %v1564 = vpop.f32.mrf.mxu0
      %v1565 = vadd.f32 %v1365, %v1564
      %v1566 = vpop.f32.mrf.mxu0
      %v1567 = vadd.f32 %v1361, %v1566
      %v1568 = vpop.f32.mrf.mxu0
      %v1569 = vadd.f32 %v1365, %v1568
      %1570 = vmatprep.mubr.bf16.mxu0 %v1309
      %1571 = vmatmul.mubr.bf16.gmra.mxu0 %v1308
      %v1572 = vpop.f32.mrf.mxu0
      %v1573 = vadd.f32 %v1361, %v1572
      %v1574 = vpop.f32.mrf.mxu0
      %v1575 = vadd.f32 %v1365, %v1574
      %v1576 = vpop.f32.mrf.mxu0
      %v1577 = vadd.f32 %v1361, %v1576
      %v1578 = vpop.f32.mrf.mxu0
      %v1579 = vadd.f32 %v1365, %v1578
      %1580 = vmatprep.mubr.bf16.mxu0 %v1311
      %1581 = vmatmul.mubr.bf16.gmra.mxu0 %v1310
      %v1582 = vpop.f32.mrf.mxu0
      %v1583 = vadd.f32 %v1361, %v1582
      %v1584 = vpop.f32.mrf.mxu0
      %v1585 = vadd.f32 %v1365, %v1584
      %v1586 = vpop.f32.mrf.mxu0
      %v1587 = vadd.f32 %v1361, %v1586
      %v1588 = vpop.f32.mrf.mxu0
      %v1589 = vadd.f32 %v1365, %v1588
      %1590 = vmatprep.mubr.bf16.mxu0 %v1313
      %1591 = vmatmul.mubr.bf16.gmra.mxu0 %v1312
      %v1592 = vpop.f32.mrf.mxu0
      %v1593 = vadd.f32 %v1361, %v1592
      %v1594 = vpop.f32.mrf.mxu0
      %v1595 = vadd.f32 %v1365, %v1594
      %v1596 = vpop.f32.mrf.mxu0
      %v1597 = vadd.f32 %v1361, %v1596
      %v1598 = vpop.f32.mrf.mxu0
      %v1599 = vadd.f32 %v1365, %v1598
      %1600 = vmatprep.mubr.bf16.mxu0 %v1315
      %1601 = vmatmul.mubr.bf16.gmra.mxu0 %v1314
      %v1602 = vpop.f32.mrf.mxu0
      %v1603 = vadd.f32 %v1361, %v1602
      %v1604 = vpop.f32.mrf.mxu0
      %v1605 = vadd.f32 %v1365, %v1604
      %v1606 = vpop.f32.mrf.mxu0
      %v1607 = vadd.f32 %v1361, %v1606
      %v1608 = vpop.f32.mrf.mxu0
      %v1609 = vadd.f32 %v1365, %v1608
      %1610 = vmatprep.mubr.bf16.mxu0 %v1317
      %1611 = vmatmul.mubr.bf16.gmra.mxu0 %v1316
      %v1612 = vpop.f32.mrf.mxu0
      %v1613 = vadd.f32 %v1361, %v1612
      %v1614 = vpop.f32.mrf.mxu0
      %v1615 = vadd.f32 %v1365, %v1614
      %v1616 = vpop.f32.mrf.mxu0
      %v1617 = vadd.f32 %v1361, %v1616
      %v1618 = vpop.f32.mrf.mxu0
      %v1619 = vadd.f32 %v1365, %v1618
      %1620 = vmatprep.mubr.bf16.mxu0 %v1319
      %1621 = vmatmul.mubr.bf16.gmra.mxu0 %v1318
      %v1622 = vpop.f32.mrf.mxu0
      %v1623 = vadd.f32 %v1361, %v1622
      %v1624 = vpop.f32.mrf.mxu0
      %v1625 = vadd.f32 %v1365, %v1624
      %v1626 = vpop.f32.mrf.mxu0
      %v1627 = vadd.f32 %v1361, %v1626
      %v1628 = vpop.f32.mrf.mxu0
      %v1629 = vadd.f32 %v1365, %v1628
      %1630 = vmatprep.mubr.bf16.mxu0 %v1321
      %1631 = vmatmul.mubr.bf16.gmra.mxu0 %v1320
      %v1632 = vpop.f32.mrf.mxu0
      %v1633 = vadd.f32 %v1361, %v1632
      %v1634 = vpop.f32.mrf.mxu0
      %v1635 = vadd.f32 %v1365, %v1634
      %v1636 = vpop.f32.mrf.mxu0
      %v1637 = vadd.f32 %v1361, %v1636
      %v1638 = vpop.f32.mrf.mxu0
      %v1639 = vadd.f32 %v1365, %v1638
      %1640 = vdwg.mxu0
      %v1641 = vmax.f32 %v1563, 0.0
      %v1642 = vmax.f32 %v1565, 0.0
      %v1643 = vmax.f32 %v1567, 0.0
      %v1644 = vmax.f32 %v1569, 0.0
      %v1645 = vmax.f32 %v1573, 0.0
      %v1646 = vmax.f32 %v1575, 0.0
      %v1647 = vmax.f32 %v1577, 0.0
      %v1648 = vmax.f32 %v1579, 0.0
      %v1649 = vmax.f32 %v1583, 0.0
      %v1650 = vmax.f32 %v1585, 0.0
      %v1651 = vmax.f32 %v1587, 0.0
      %v1652 = vmax.f32 %v1589, 0.0
      %v1653 = vmax.f32 %v1593, 0.0
      %v1654 = vmax.f32 %v1595, 0.0
      %v1655 = vmax.f32 %v1597, 0.0
      %v1656 = vmax.f32 %v1599, 0.0
      %v1657 = vmax.f32 %v1603, 0.0
      %v1658 = vmax.f32 %v1605, 0.0
      %v1659 = vmax.f32 %v1607, 0.0
      %v1660 = vmax.f32 %v1609, 0.0
      %v1661 = vmax.f32 %v1613, 0.0
      %v1662 = vmax.f32 %v1615, 0.0
      %v1663 = vmax.f32 %v1617, 0.0
      %v1664 = vmax.f32 %v1619, 0.0
      %v1665 = vmax.f32 %v1623, 0.0
      %v1666 = vmax.f32 %v1625, 0.0
      %v1667 = vmax.f32 %v1627, 0.0
      %v1668 = vmax.f32 %v1629, 0.0
      %v1669 = vmax.f32 %v1633, 0.0
      %v1670 = vmax.f32 %v1635, 0.0
      %v1671 = vmax.f32 %v1637, 0.0
      %v1672 = vmax.f32 %v1639, 0.0
      %v1673 = vpack.c.bf16 %v1643, %v1641
      %v1674 = vpack.c.bf16 %v1644, %v1642
      %v1675 = vpack.c.bf16 %v1647, %v1645
      %v1676 = vpack.c.bf16 %v1648, %v1646
      %v1677 = vpack.c.bf16 %v1651, %v1649
      %v1678 = vpack.c.bf16 %v1652, %v1650
      %v1679 = vpack.c.bf16 %v1655, %v1653
      %v1680 = vpack.c.bf16 %v1656, %v1654
      %v1681 = vpack.c.bf16 %v1659, %v1657
      %v1682 = vpack.c.bf16 %v1660, %v1658
      %v1683 = vpack.c.bf16 %v1663, %v1661
      %v1684 = vpack.c.bf16 %v1664, %v1662
      %v1685 = vpack.c.bf16 %v1667, %v1665
      %v1686 = vpack.c.bf16 %v1668, %v1666
      %v1687 = vpack.c.bf16 %v1671, %v1669
      %v1688 = vpack.c.bf16 %v1672, %v1670
      %s1689 = scalar_lea.vmem %s2, 768
      %v1690 = vld [vmem:[%s1689] sm:$0xff]
      %v1691 = vld [vmem:[%s1689 + $0x8] sm:$0xff]
      %v1692 = vld [vmem:[%s1689 + $0x10] sm:$0xff]
      %v1693 = vld [vmem:[%s1689 + $0x18] sm:$0xff]
      %v1694 = vld [vmem:[%s1689 + $0x20] sm:$0xff]
      %v1695 = vld [vmem:[%s1689 + $0x28] sm:$0xff]
      %v1696 = vld [vmem:[%s1689 + $0x30] sm:$0xff]
      %v1697 = vld [vmem:[%s1689 + $0x38] sm:$0xff]
      %v1698 = vld [vmem:[%s1689 + $0x40] sm:$0xff]
      %v1699 = vld [vmem:[%s1689 + $0x48] sm:$0xff]
      %v1700 = vld [vmem:[%s1689 + $0x50] sm:$0xff]
      %v1701 = vld [vmem:[%s1689 + $0x58] sm:$0xff]
      %v1702 = vld [vmem:[%s1689 + $0x60] sm:$0xff]
      %v1703 = vld [vmem:[%s1689 + $0x68] sm:$0xff]
      %v1704 = vld [vmem:[%s1689 + $0x70] sm:$0xff]
      %v1705 = vld [vmem:[%s1689 + $0x78] sm:$0xff]
      %v1706 = vld [vmem:[%s1689 + $0x80] sm:$0xff]
      %v1707 = vld [vmem:[%s1689 + $0x88] sm:$0xff]
      %v1708 = vld [vmem:[%s1689 + $0x90] sm:$0xff]
      %v1709 = vld [vmem:[%s1689 + $0x98] sm:$0xff]
      %v1710 = vld [vmem:[%s1689 + $0xa0] sm:$0xff]
      %v1711 = vld [vmem:[%s1689 + $0xa8] sm:$0xff]
      %v1712 = vld [vmem:[%s1689 + $0xb0] sm:$0xff]
      %v1713 = vld [vmem:[%s1689 + $0xb8] sm:$0xff]
      %v1714 = vld [vmem:[%s1689 + $0xc0] sm:$0xff]
      %v1715 = vld [vmem:[%s1689 + $0xc8] sm:$0xff]
      %v1716 = vld [vmem:[%s1689 + $0xd0] sm:$0xff]
      %v1717 = vld [vmem:[%s1689 + $0xd8] sm:$0xff]
      %v1718 = vld [vmem:[%s1689 + $0xe0] sm:$0xff]
      %v1719 = vld [vmem:[%s1689 + $0xe8] sm:$0xff]
      %v1720 = vld [vmem:[%s1689 + $0xf0] sm:$0xff]
      %v1721 = vld [vmem:[%s1689 + $0xf8] sm:$0xff]
      %s1722 = scalar_lea.vmem %s4, 8
      %v1723 = vld [vmem:[%s1722] sm:$0x3]
      %v1725 = vlaneseq
      %v1726 = vshrl.u32 %v1725, 7
      %v1727 = vsub.s32 0, %v1726
      %v1728 = vrot.slane %v1723, %v1727
      %v1729 = vlaneseq
      %v1730 = vshrl.u32 %v1729, 7
      %v1731 = vsub.s32 1, %v1730
      %v1732 = vrot.slane %v1723, %v1731
      %v1767 = vunpack.c.l.b16 %v1690
      %v1768 = vunpack.c.h.b16 %v1690
      %v1769 = vunpack.c.l.b16 %v1691
      %v1770 = vunpack.c.h.b16 %v1691
      %v1771 = vunpack.c.l.b16 %v1692
      %v1772 = vunpack.c.h.b16 %v1692
      %v1773 = vunpack.c.l.b16 %v1693
      %v1774 = vunpack.c.h.b16 %v1693
      %v1775 = vunpack.c.l.b16 %v1694
      %v1776 = vunpack.c.h.b16 %v1694
      %v1777 = vunpack.c.l.b16 %v1695
      %v1778 = vunpack.c.h.b16 %v1695
      %v1779 = vunpack.c.l.b16 %v1696
      %v1780 = vunpack.c.h.b16 %v1696
      %v1781 = vunpack.c.l.b16 %v1697
      %v1782 = vunpack.c.h.b16 %v1697
      %v1783 = vunpack.c.l.b16 %v1698
      %v1784 = vunpack.c.h.b16 %v1698
      %v1785 = vunpack.c.l.b16 %v1699
      %v1786 = vunpack.c.h.b16 %v1699
      %v1787 = vunpack.c.l.b16 %v1700
      %v1788 = vunpack.c.h.b16 %v1700
      %v1789 = vunpack.c.l.b16 %v1701
      %v1790 = vunpack.c.h.b16 %v1701
      %v1791 = vunpack.c.l.b16 %v1702
      %v1792 = vunpack.c.h.b16 %v1702
      %v1793 = vunpack.c.l.b16 %v1703
      %v1794 = vunpack.c.h.b16 %v1703
      %v1795 = vunpack.c.l.b16 %v1704
      %v1796 = vunpack.c.h.b16 %v1704
      %v1797 = vunpack.c.l.b16 %v1705
      %v1798 = vunpack.c.h.b16 %v1705
      %v1799 = vunpack.c.l.b16 %v1706
      %v1800 = vunpack.c.h.b16 %v1706
      %v1801 = vunpack.c.l.b16 %v1707
      %v1802 = vunpack.c.h.b16 %v1707
      %v1803 = vunpack.c.l.b16 %v1708
      %v1804 = vunpack.c.h.b16 %v1708
      %v1805 = vunpack.c.l.b16 %v1709
      %v1806 = vunpack.c.h.b16 %v1709
      %v1807 = vunpack.c.l.b16 %v1710
      %v1808 = vunpack.c.h.b16 %v1710
      %v1809 = vunpack.c.l.b16 %v1711
      %v1810 = vunpack.c.h.b16 %v1711
      %v1811 = vunpack.c.l.b16 %v1712
      %v1812 = vunpack.c.h.b16 %v1712
      %v1813 = vunpack.c.l.b16 %v1713
      %v1814 = vunpack.c.h.b16 %v1713
      %v1815 = vunpack.c.l.b16 %v1714
      %v1816 = vunpack.c.h.b16 %v1714
      %v1817 = vunpack.c.l.b16 %v1715
      %v1818 = vunpack.c.h.b16 %v1715
      %v1819 = vunpack.c.l.b16 %v1716
      %v1820 = vunpack.c.h.b16 %v1716
      %v1821 = vunpack.c.l.b16 %v1717
      %v1822 = vunpack.c.h.b16 %v1717
      %v1823 = vunpack.c.l.b16 %v1718
      %v1824 = vunpack.c.h.b16 %v1718
      %v1825 = vunpack.c.l.b16 %v1719
      %v1826 = vunpack.c.h.b16 %v1719
      %v1827 = vunpack.c.l.b16 %v1720
      %v1828 = vunpack.c.h.b16 %v1720
      %v1829 = vunpack.c.l.b16 %v1721
      %v1830 = vunpack.c.h.b16 %v1721
      %v1831 = vpack.c.b16 %v1769, %v1767
      %v1832 = vpack.c.b16 %v1770, %v1768
      %v1833 = vpack.c.b16 %v1773, %v1771
      %v1834 = vpack.c.b16 %v1774, %v1772
      %v1835 = vpack.c.b16 %v1777, %v1775
      %v1836 = vpack.c.b16 %v1778, %v1776
      %v1837 = vpack.c.b16 %v1781, %v1779
      %v1838 = vpack.c.b16 %v1782, %v1780
      %v1839 = vpack.c.b16 %v1785, %v1783
      %v1840 = vpack.c.b16 %v1786, %v1784
      %v1841 = vpack.c.b16 %v1789, %v1787
      %v1842 = vpack.c.b16 %v1790, %v1788
      %v1843 = vpack.c.b16 %v1793, %v1791
      %v1844 = vpack.c.b16 %v1794, %v1792
      %v1845 = vpack.c.b16 %v1797, %v1795
      %v1846 = vpack.c.b16 %v1798, %v1796
      %v1847 = vpack.c.b16 %v1801, %v1799
      %v1848 = vpack.c.b16 %v1802, %v1800
      %v1849 = vpack.c.b16 %v1805, %v1803
      %v1850 = vpack.c.b16 %v1806, %v1804
      %v1851 = vpack.c.b16 %v1809, %v1807
      %v1852 = vpack.c.b16 %v1810, %v1808
      %v1853 = vpack.c.b16 %v1813, %v1811
      %v1854 = vpack.c.b16 %v1814, %v1812
      %v1855 = vpack.c.b16 %v1817, %v1815
      %v1856 = vpack.c.b16 %v1818, %v1816
      %v1857 = vpack.c.b16 %v1821, %v1819
      %v1858 = vpack.c.b16 %v1822, %v1820
      %v1859 = vpack.c.b16 %v1825, %v1823
      %v1860 = vpack.c.b16 %v1826, %v1824
      %v1861 = vpack.c.b16 %v1829, %v1827
      %v1862 = vpack.c.b16 %v1830, %v1828
      %1895 = vmatprep.subr.bf16.mxu0 %v1846
      %1896 = vmatpush1.bf16.msra.mxu0 %v1845
      %1897 = vmatprep.subr.bf16.mxu0 %v1844
      %1898 = vmatpush1.bf16.msra.mxu0 %v1843
      %1899 = vmatprep.subr.bf16.mxu0 %v1842
      %1900 = vmatpush1.bf16.msra.mxu0 %v1841
      %1901 = vmatprep.subr.bf16.mxu0 %v1840
      %1902 = vmatpush1.bf16.msra.mxu0 %v1839
      %1903 = vmatprep.subr.bf16.mxu0 %v1838
      %1904 = vmatpush1.bf16.msra.mxu0 %v1837
      %1905 = vmatprep.subr.bf16.mxu0 %v1836
      %1906 = vmatpush1.bf16.msra.mxu0 %v1835
      %1907 = vmatprep.subr.bf16.mxu0 %v1834
      %1908 = vmatpush1.bf16.msra.mxu0 %v1833
      %1909 = vmatprep.subr.bf16.mxu0 %v1832
      %1910 = vmatpush1.bf16.msra.mxu0 %v1831
      %1911 = vmatprep.subr.bf16.mxu0 %v1862
      %1912 = vmatpush2.bf16.msra.mxu0 %v1861
      %1913 = vmatprep.subr.bf16.mxu0 %v1860
      %1914 = vmatpush2.bf16.msra.mxu0 %v1859
      %1915 = vmatprep.subr.bf16.mxu0 %v1858
      %1916 = vmatpush2.bf16.msra.mxu0 %v1857
      %1917 = vmatprep.subr.bf16.mxu0 %v1856
      %1918 = vmatpush2.bf16.msra.mxu0 %v1855
      %1919 = vmatprep.subr.bf16.mxu0 %v1854
      %1920 = vmatpush2.bf16.msra.mxu0 %v1853
      %1921 = vmatprep.subr.bf16.mxu0 %v1852
      %1922 = vmatpush2.bf16.msra.mxu0 %v1851
      %1923 = vmatprep.subr.bf16.mxu0 %v1850
      %1924 = vmatpush2.bf16.msra.mxu0 %v1849
      %1925 = vmatprep.subr.bf16.mxu0 %v1848
      %1926 = vmatpush2.bf16.msra.mxu0 %v1847
      %1927 = vmatprep.mubr.bf16.mxu0 %v1674
      %1928 = vmatmul.mubr.bf16.gmra.mxu0 %v1673
      %v1929 = vpop.f32.mrf.mxu0
      %v1930 = vadd.f32 %v1728, %v1929
      %v1931 = vpop.f32.mrf.mxu0
      %v1932 = vadd.f32 %v1732, %v1931
      %v1933 = vpop.f32.mrf.mxu0
      %v1934 = vadd.f32 %v1728, %v1933
      %v1935 = vpop.f32.mrf.mxu0
      %v1936 = vadd.f32 %v1732, %v1935
      %1937 = vmatprep.mubr.bf16.mxu0 %v1676
      %1938 = vmatmul.mubr.bf16.gmra.mxu0 %v1675
      %v1939 = vpop.f32.mrf.mxu0
      %v1940 = vadd.f32 %v1728, %v1939
      %v1941 = vpop.f32.mrf.mxu0
      %v1942 = vadd.f32 %v1732, %v1941
      %v1943 = vpop.f32.mrf.mxu0
      %v1944 = vadd.f32 %v1728, %v1943
      %v1945 = vpop.f32.mrf.mxu0
      %v1946 = vadd.f32 %v1732, %v1945
      %1947 = vmatprep.mubr.bf16.mxu0 %v1678
      %1948 = vmatmul.mubr.bf16.gmra.mxu0 %v1677
      %v1949 = vpop.f32.mrf.mxu0
      %v1950 = vadd.f32 %v1728, %v1949
      %v1951 = vpop.f32.mrf.mxu0
      %v1952 = vadd.f32 %v1732, %v1951
      %v1953 = vpop.f32.mrf.mxu0
      %v1954 = vadd.f32 %v1728, %v1953
      %v1955 = vpop.f32.mrf.mxu0
      %v1956 = vadd.f32 %v1732, %v1955
      %1957 = vmatprep.mubr.bf16.mxu0 %v1680
      %1958 = vmatmul.mubr.bf16.gmra.mxu0 %v1679
      %v1959 = vpop.f32.mrf.mxu0
      %v1960 = vadd.f32 %v1728, %v1959
      %v1961 = vpop.f32.mrf.mxu0
      %v1962 = vadd.f32 %v1732, %v1961
      %v1963 = vpop.f32.mrf.mxu0
      %v1964 = vadd.f32 %v1728, %v1963
      %v1965 = vpop.f32.mrf.mxu0
      %v1966 = vadd.f32 %v1732, %v1965
      %1967 = vmatprep.mubr.bf16.mxu0 %v1682
      %1968 = vmatmul.mubr.bf16.gmra.mxu0 %v1681
      %v1969 = vpop.f32.mrf.mxu0
      %v1970 = vadd.f32 %v1728, %v1969
      %v1971 = vpop.f32.mrf.mxu0
      %v1972 = vadd.f32 %v1732, %v1971
      %v1973 = vpop.f32.mrf.mxu0
      %v1974 = vadd.f32 %v1728, %v1973
      %v1975 = vpop.f32.mrf.mxu0
      %v1976 = vadd.f32 %v1732, %v1975
      %1977 = vmatprep.mubr.bf16.mxu0 %v1684
      %1978 = vmatmul.mubr.bf16.gmra.mxu0 %v1683
      %v1979 = vpop.f32.mrf.mxu0
      %v1980 = vadd.f32 %v1728, %v1979
      %v1981 = vpop.f32.mrf.mxu0
      %v1982 = vadd.f32 %v1732, %v1981
      %v1983 = vpop.f32.mrf.mxu0
      %v1984 = vadd.f32 %v1728, %v1983
      %v1985 = vpop.f32.mrf.mxu0
      %v1986 = vadd.f32 %v1732, %v1985
      %1987 = vmatprep.mubr.bf16.mxu0 %v1686
      %1988 = vmatmul.mubr.bf16.gmra.mxu0 %v1685
      %v1989 = vpop.f32.mrf.mxu0
      %v1990 = vadd.f32 %v1728, %v1989
      %v1991 = vpop.f32.mrf.mxu0
      %v1992 = vadd.f32 %v1732, %v1991
      %v1993 = vpop.f32.mrf.mxu0
      %v1994 = vadd.f32 %v1728, %v1993
      %v1995 = vpop.f32.mrf.mxu0
      %v1996 = vadd.f32 %v1732, %v1995
      %1997 = vmatprep.mubr.bf16.mxu0 %v1688
      %1998 = vmatmul.mubr.bf16.gmra.mxu0 %v1687
      %v1999 = vpop.f32.mrf.mxu0
      %v2000 = vadd.f32 %v1728, %v1999
      %v2001 = vpop.f32.mrf.mxu0
      %v2002 = vadd.f32 %v1732, %v2001
      %v2003 = vpop.f32.mrf.mxu0
      %v2004 = vadd.f32 %v1728, %v2003
      %v2005 = vpop.f32.mrf.mxu0
      %v2006 = vadd.f32 %v1732, %v2005
      %2007 = vdwg.mxu0
      %v2008 = vmax.f32 %v1930, 0.0
      %v2009 = vmax.f32 %v1932, 0.0
      %v2010 = vmax.f32 %v1934, 0.0
      %v2011 = vmax.f32 %v1936, 0.0
      %v2012 = vmax.f32 %v1940, 0.0
      %v2013 = vmax.f32 %v1942, 0.0
      %v2014 = vmax.f32 %v1944, 0.0
      %v2015 = vmax.f32 %v1946, 0.0
      %v2016 = vmax.f32 %v1950, 0.0
      %v2017 = vmax.f32 %v1952, 0.0
      %v2018 = vmax.f32 %v1954, 0.0
      %v2019 = vmax.f32 %v1956, 0.0
      %v2020 = vmax.f32 %v1960, 0.0
      %v2021 = vmax.f32 %v1962, 0.0
      %v2022 = vmax.f32 %v1964, 0.0
      %v2023 = vmax.f32 %v1966, 0.0
      %v2024 = vmax.f32 %v1970, 0.0
      %v2025 = vmax.f32 %v1972, 0.0
      %v2026 = vmax.f32 %v1974, 0.0
      %v2027 = vmax.f32 %v1976, 0.0
      %v2028 = vmax.f32 %v1980, 0.0
      %v2029 = vmax.f32 %v1982, 0.0
      %v2030 = vmax.f32 %v1984, 0.0
      %v2031 = vmax.f32 %v1986, 0.0
      %v2032 = vmax.f32 %v1990, 0.0
      %v2033 = vmax.f32 %v1992, 0.0
      %v2034 = vmax.f32 %v1994, 0.0
      %v2035 = vmax.f32 %v1996, 0.0
      %v2036 = vmax.f32 %v2000, 0.0
      %v2037 = vmax.f32 %v2002, 0.0
      %v2038 = vmax.f32 %v2004, 0.0
      %v2039 = vmax.f32 %v2006, 0.0
      %v2040 = vpack.c.bf16 %v2010, %v2008
      %v2041 = vpack.c.bf16 %v2011, %v2009
      %v2042 = vpack.c.bf16 %v2014, %v2012
      %v2043 = vpack.c.bf16 %v2015, %v2013
      %v2044 = vpack.c.bf16 %v2018, %v2016
      %v2045 = vpack.c.bf16 %v2019, %v2017
      %v2046 = vpack.c.bf16 %v2022, %v2020
      %v2047 = vpack.c.bf16 %v2023, %v2021
      %v2048 = vpack.c.bf16 %v2026, %v2024
      %v2049 = vpack.c.bf16 %v2027, %v2025
      %v2050 = vpack.c.bf16 %v2030, %v2028
      %v2051 = vpack.c.bf16 %v2031, %v2029
      %v2052 = vpack.c.bf16 %v2034, %v2032
      %v2053 = vpack.c.bf16 %v2035, %v2033
      %v2054 = vpack.c.bf16 %v2038, %v2036
      %v2055 = vpack.c.bf16 %v2039, %v2037
      %v2056 = vld [vmem:[%s3] sm:$0xf]
      %v2057 = vld [vmem:[%s3 + $0x4] sm:$0xf]
      %v2058 = vld [vmem:[%s3 + $0x8] sm:$0xf]
      %v2059 = vld [vmem:[%s3 + $0xc] sm:$0xf]
      %v2060 = vld [vmem:[%s3 + $0x10] sm:$0xf]
      %v2061 = vld [vmem:[%s3 + $0x14] sm:$0xf]
      %v2062 = vld [vmem:[%s3 + $0x18] sm:$0xf]
      %v2063 = vld [vmem:[%s3 + $0x1c] sm:$0xf]
      %v2064 = vld [vmem:[%s3 + $0x20] sm:$0xf]
      %v2065 = vld [vmem:[%s3 + $0x24] sm:$0xf]
      %v2066 = vld [vmem:[%s3 + $0x28] sm:$0xf]
      %v2067 = vld [vmem:[%s3 + $0x2c] sm:$0xf]
      %v2068 = vld [vmem:[%s3 + $0x30] sm:$0xf]
      %v2069 = vld [vmem:[%s3 + $0x34] sm:$0xf]
      %v2070 = vld [vmem:[%s3 + $0x38] sm:$0xf]
      %v2071 = vld [vmem:[%s3 + $0x3c] sm:$0xf]
      %v2072 = vld [vmem:[%s3 + $0x40] sm:$0xf]
      %v2073 = vld [vmem:[%s3 + $0x44] sm:$0xf]
      %v2074 = vld [vmem:[%s3 + $0x48] sm:$0xf]
      %v2075 = vld [vmem:[%s3 + $0x4c] sm:$0xf]
      %v2076 = vld [vmem:[%s3 + $0x50] sm:$0xf]
      %v2077 = vld [vmem:[%s3 + $0x54] sm:$0xf]
      %v2078 = vld [vmem:[%s3 + $0x58] sm:$0xf]
      %v2079 = vld [vmem:[%s3 + $0x5c] sm:$0xf]
      %v2080 = vld [vmem:[%s3 + $0x60] sm:$0xf]
      %v2081 = vld [vmem:[%s3 + $0x64] sm:$0xf]
      %v2082 = vld [vmem:[%s3 + $0x68] sm:$0xf]
      %v2083 = vld [vmem:[%s3 + $0x6c] sm:$0xf]
      %v2084 = vld [vmem:[%s3 + $0x70] sm:$0xf]
      %v2085 = vld [vmem:[%s3 + $0x74] sm:$0xf]
      %v2086 = vld [vmem:[%s3 + $0x78] sm:$0xf]
      %v2087 = vld [vmem:[%s3 + $0x7c] sm:$0xf]
      %v2088 = vld [vmem:[%s5] sm:$0x1]
      %v2090 = vlaneseq
      %v2091 = vshrl.u32 %v2090, 7
      %v2092 = vsub.s32 0, %v2091
      %v2093 = vrot.slane %v2088, %v2092
      %v2127 = vunpack.c.l.b16 %v2056
      %v2128 = vunpack.c.l.b16 %v2057
      %v2129 = vunpack.c.l.b16 %v2058
      %v2130 = vunpack.c.l.b16 %v2059
      %v2131 = vunpack.c.l.b16 %v2060
      %v2132 = vunpack.c.l.b16 %v2061
      %v2133 = vunpack.c.l.b16 %v2062
      %v2134 = vunpack.c.l.b16 %v2063
      %v2135 = vunpack.c.l.b16 %v2064
      %v2136 = vunpack.c.l.b16 %v2065
      %v2137 = vunpack.c.l.b16 %v2066
      %v2138 = vunpack.c.l.b16 %v2067
      %v2139 = vunpack.c.l.b16 %v2068
      %v2140 = vunpack.c.l.b16 %v2069
      %v2141 = vunpack.c.l.b16 %v2070
      %v2142 = vunpack.c.l.b16 %v2071
      %v2143 = vunpack.c.l.b16 %v2072
      %v2144 = vunpack.c.l.b16 %v2073
      %v2145 = vunpack.c.l.b16 %v2074
      %v2146 = vunpack.c.l.b16 %v2075
      %v2147 = vunpack.c.l.b16 %v2076
      %v2148 = vunpack.c.l.b16 %v2077
      %v2149 = vunpack.c.l.b16 %v2078
      %v2150 = vunpack.c.l.b16 %v2079
      %v2151 = vunpack.c.l.b16 %v2080
      %v2152 = vunpack.c.l.b16 %v2081
      %v2153 = vunpack.c.l.b16 %v2082
      %v2154 = vunpack.c.l.b16 %v2083
      %v2155 = vunpack.c.l.b16 %v2084
      %v2156 = vunpack.c.l.b16 %v2085
      %v2157 = vunpack.c.l.b16 %v2086
      %v2158 = vunpack.c.l.b16 %v2087
      %v2159 = vpack.c.b16 %v2128, %v2127
      %v2160 = vpack.c.b16 %v2130, %v2129
      %v2161 = vpack.c.b16 %v2132, %v2131
      %v2162 = vpack.c.b16 %v2134, %v2133
      %v2163 = vpack.c.b16 %v2136, %v2135
      %v2164 = vpack.c.b16 %v2138, %v2137
      %v2165 = vpack.c.b16 %v2140, %v2139
      %v2166 = vpack.c.b16 %v2142, %v2141
      %v2167 = vpack.c.b16 %v2144, %v2143
      %v2168 = vpack.c.b16 %v2146, %v2145
      %v2169 = vpack.c.b16 %v2148, %v2147
      %v2170 = vpack.c.b16 %v2150, %v2149
      %v2171 = vpack.c.b16 %v2152, %v2151
      %v2172 = vpack.c.b16 %v2154, %v2153
      %v2173 = vpack.c.b16 %v2156, %v2155
      %v2174 = vpack.c.b16 %v2158, %v2157
      %2191 = vmatprep.subr.bf16.mxu0 0
      %2192 = vmatpush1.bf16.msra.mxu0 %v2166
      %2193 = vmatprep.subr.bf16.mxu0 0
      %2194 = vmatpush1.bf16.msra.mxu0 %v2165
      %2195 = vmatprep.subr.bf16.mxu0 0
      %2196 = vmatpush1.bf16.msra.mxu0 %v2164
      %2197 = vmatprep.subr.bf16.mxu0 0
      %2198 = vmatpush1.bf16.msra.mxu0 %v2163
      %2199 = vmatprep.subr.bf16.mxu0 0
      %2200 = vmatpush1.bf16.msra.mxu0 %v2162
      %2201 = vmatprep.subr.bf16.mxu0 0
      %2202 = vmatpush1.bf16.msra.mxu0 %v2161
      %2203 = vmatprep.subr.bf16.mxu0 0
      %2204 = vmatpush1.bf16.msra.mxu0 %v2160
      %2205 = vmatprep.subr.bf16.mxu0 0
      %2206 = vmatpush1.bf16.msra.mxu0 %v2159
      %2207 = vmatprep.subr.bf16.mxu0 0
      %2208 = vmatpush2.bf16.msra.mxu0 %v2174
      %2209 = vmatprep.subr.bf16.mxu0 0
      %2210 = vmatpush2.bf16.msra.mxu0 %v2173
      %2211 = vmatprep.subr.bf16.mxu0 0
      %2212 = vmatpush2.bf16.msra.mxu0 %v2172
      %2213 = vmatprep.subr.bf16.mxu0 0
      %2214 = vmatpush2.bf16.msra.mxu0 %v2171
      %2215 = vmatprep.subr.bf16.mxu0 0
      %2216 = vmatpush2.bf16.msra.mxu0 %v2170
      %2217 = vmatprep.subr.bf16.mxu0 0
      %2218 = vmatpush2.bf16.msra.mxu0 %v2169
      %2219 = vmatprep.subr.bf16.mxu0 0
      %2220 = vmatpush2.bf16.msra.mxu0 %v2168
      %2221 = vmatprep.subr.bf16.mxu0 0
      %2222 = vmatpush2.bf16.msra.mxu0 %v2167
      %2223 = vmatprep.mubr.bf16.mxu0 %v2041
      %2224 = vmatmul.mubr.bf16.gmra.mxu0 %v2040
      %v2225 = vpop.f32.mrf.mxu0
      %v2226 = vadd.f32 %v2093, %v2225
      %v2227 = vpop.f32.mrf.mxu0
      %v2228 = vpop.f32.mrf.mxu0
      %v2229 = vadd.f32 %v2093, %v2228
      %v2230 = vpop.f32.mrf.mxu0
      %2231 = vmatprep.mubr.bf16.mxu0 %v2043
      %2232 = vmatmul.mubr.bf16.gmra.mxu0 %v2042
      %v2233 = vpop.f32.mrf.mxu0
      %v2234 = vadd.f32 %v2093, %v2233
      %v2235 = vpop.f32.mrf.mxu0
      %v2236 = vpop.f32.mrf.mxu0
      %v2237 = vadd.f32 %v2093, %v2236
      %v2238 = vpop.f32.mrf.mxu0
      %2239 = vmatprep.mubr.bf16.mxu0 %v2045
      %2240 = vmatmul.mubr.bf16.gmra.mxu0 %v2044
      %v2241 = vpop.f32.mrf.mxu0
      %v2242 = vadd.f32 %v2093, %v2241
      %v2243 = vpop.f32.mrf.mxu0
      %v2244 = vpop.f32.mrf.mxu0
      %v2245 = vadd.f32 %v2093, %v2244
      %v2246 = vpop.f32.mrf.mxu0
      %2247 = vmatprep.mubr.bf16.mxu0 %v2047
      %2248 = vmatmul.mubr.bf16.gmra.mxu0 %v2046
      %v2249 = vpop.f32.mrf.mxu0
      %v2250 = vadd.f32 %v2093, %v2249
      %v2251 = vpop.f32.mrf.mxu0
      %v2252 = vpop.f32.mrf.mxu0
      %v2253 = vadd.f32 %v2093, %v2252
      %v2254 = vpop.f32.mrf.mxu0
      %2255 = vmatprep.mubr.bf16.mxu0 %v2049
      %2256 = vmatmul.mubr.bf16.gmra.mxu0 %v2048
      %v2257 = vpop.f32.mrf.mxu0
      %v2258 = vadd.f32 %v2093, %v2257
      %v2259 = vpop.f32.mrf.mxu0
      %v2260 = vpop.f32.mrf.mxu0
      %v2261 = vadd.f32 %v2093, %v2260
      %v2262 = vpop.f32.mrf.mxu0
      %2263 = vmatprep.mubr.bf16.mxu0 %v2051
      %2264 = vmatmul.mubr.bf16.gmra.mxu0 %v2050
      %v2265 = vpop.f32.mrf.mxu0
      %v2266 = vadd.f32 %v2093, %v2265
      %v2267 = vpop.f32.mrf.mxu0
      %v2268 = vpop.f32.mrf.mxu0
      %v2269 = vadd.f32 %v2093, %v2268
      %v2270 = vpop.f32.mrf.mxu0
      %2271 = vmatprep.mubr.bf16.mxu0 %v2053
      %2272 = vmatmul.mubr.bf16.gmra.mxu0 %v2052
      %v2273 = vpop.f32.mrf.mxu0
      %v2274 = vadd.f32 %v2093, %v2273
      %v2275 = vpop.f32.mrf.mxu0
      %v2276 = vpop.f32.mrf.mxu0
      %v2277 = vadd.f32 %v2093, %v2276
      %v2278 = vpop.f32.mrf.mxu0
      %2279 = vmatprep.mubr.bf16.mxu0 %v2055
      %2280 = vmatmul.mubr.bf16.gmra.mxu0 %v2054
      %v2281 = vpop.f32.mrf.mxu0
      %v2282 = vadd.f32 %v2093, %v2281
      %v2283 = vpop.f32.mrf.mxu0
      %v2284 = vpop.f32.mrf.mxu0
      %v2285 = vadd.f32 %v2093, %v2284
      %v2286 = vpop.f32.mrf.mxu0
      %2287 = vdwg.mxu0
      %2288 = vst [vmem:[%s253] sm:$0xff] %v2226
      %2289 = vst [vmem:[%s253 + $0x8] sm:$0xff] %v2229
      %2290 = vst [vmem:[%s253 + $0x10] sm:$0xff] %v2234
      %2291 = vst [vmem:[%s253 + $0x18] sm:$0xff] %v2237
      %2292 = vst [vmem:[%s253 + $0x20] sm:$0xff] %v2242
      %2293 = vst [vmem:[%s253 + $0x28] sm:$0xff] %v2245
      %2294 = vst [vmem:[%s253 + $0x30] sm:$0xff] %v2250
      %2295 = vst [vmem:[%s253 + $0x38] sm:$0xff] %v2253
      %2296 = vst [vmem:[%s253 + $0x40] sm:$0xff] %v2258
      %2297 = vst [vmem:[%s253 + $0x48] sm:$0xff] %v2261
      %2298 = vst [vmem:[%s253 + $0x50] sm:$0xff] %v2266
      %2299 = vst [vmem:[%s253 + $0x58] sm:$0xff] %v2269
      %2300 = vst [vmem:[%s253 + $0x60] sm:$0xff] %v2274
      %2301 = vst [vmem:[%s253 + $0x68] sm:$0xff] %v2277
      %2302 = vst [vmem:[%s253 + $0x70] sm:$0xff] %v2282
      %2303 = vst [vmem:[%s253 + $0x78] sm:$0xff] %v2285
      %s2304 = smul.u32 16, %s17
      %p2305 = scmp.lt.s32.totalorder %s2304, 63
      %s2306 = scalar_select %p2305, %s2304, 63
      %s2307 = smul.addr %s2306, 8
      %s2308 = scalar_lea.vmem %s6, %s2307
      // Predicated region
      $region45: #{defnet_forward.1} parent=43 // pred_check
        %p2309 = pneg %p166
      $region46: #{defnet_forward.1} parent=43 // pred_check_branch
        %2311 = sbr.rel (%p2309) target = $region48
      $region47: #{defnet_forward.1} parent=43 // pred_region
        %s2312 = smul.u32 16, %s17
      $region48: #{defnet_forward.1} parent=43 // pred_fallthru
        _
    $region44: #{defnet_forward.1} parent=5 // pred_fallthru
      _
    %p2313 = scmp.le.s32.totalorder 2, %s12
    // Predicated region
    $region49: #{defnet_forward.1} parent=5 // pred_check
      %p2314 = pneg %p2313
    $region50: #{defnet_forward.1} parent=5 // pred_check_branch
      %2316 = sbr.rel (%p2314) target = $region52
    $region51: #{defnet_forward.1} parent=5 // pred_region
      %s2317 = ssub.s32 %s12, 2
      // Predicated region
      $region53: #{defnet_forward.1} parent=51 // pred_check
        %p2318 = pneg %p172
      $region54: #{defnet_forward.1} parent=51 // pred_check_branch
        %2320 = sbr.rel (%p2318) target = $region56
      $region55: #{defnet_forward.1} parent=51 // pred_region
        %s2321 = smul.u32 16, %s18
        %p2322 = scmp.lt.s32.totalorder %s2321, 63
        %s2323 = scalar_select %p2322, %s2321, 63
        %s2324 = smul.addr %s2323, 8
        %s2325 = scalar_lea.vmem %s6, %s2324
      $region56: #{defnet_forward.1} parent=51 // pred_fallthru
        _
    $region52: #{defnet_forward.1} parent=5 // pred_fallthru
      _
  $region6: #{defnet_forward.1} parent=0 // loop_footer
    %s16 = sadd.s32 1, %s12
  $region7: #{defnet_forward.1} parent=0 // loop_footer_branch
    %11 = sbr.rel target = $region3
  $region8: #{defnet_forward.1} parent=0 // loop_exit
    _

</llo_original>
